<compile_context>
chip_gen: v6e
topology: v6e:2x2x1
jax: 0.10.0
libtpu: 0.0.40
codegen_flags: <defaults>
</compile_context>

<pallas_src>
import jax
import jax.numpy as jnp
from jax.experimental import pallas as pl
from jax.experimental.pallas import tpu as pltpu


# ----------------------------------------------------------------------------
# Fused forward kernel: one grid step == one image, everything stays in VMEM.
# ----------------------------------------------------------------------------
def _lenet_kernel(x_ref, wb1_ref, b1_ref, rs1_ref, ps1_ref,
                  wb2_ref, b2_ref, rs2_ref, ps2_ref,
                  w4_ref, b4_ref, w5_ref, b5_ref, out_ref):
    f32 = jnp.float32
    bf16 = jnp.bfloat16

    x = x_ref[0].astype(bf16)                                   # (28, 28)

    # ---- conv1 (1->8, 5x5, VALID) + bias + ReLU --------------> (24, 24*8)
    acc = jnp.zeros((24, 192), f32)
    for i in range(5):                                          # 5 row bands
        acc += jnp.dot(x[i:i + 24, :], wb1_ref[i],
                       preferred_element_type=f32)
    h = jnp.maximum(acc + b1_ref[...], 0.0)

    # ---- maxpool 2x2 #1 (rows via left one-hot, cols via right) -> (12, 12*8)
    h = jnp.maximum(jnp.dot(rs1_ref[0], h), jnp.dot(rs1_ref[1], h))
    h = jnp.maximum(jnp.dot(h, ps1_ref[0]), jnp.dot(h, ps1_ref[1]))

    # ---- conv2 (8->8, 5x5, VALID) + bias + ReLU --------------> (8, 8*8)
    hb = h.astype(bf16)
    acc = jnp.zeros((8, 64), f32)
    for i in range(5):
        acc += jnp.dot(hb[i:i + 8, :], wb2_ref[i],
                       preferred_element_type=f32)
    h = jnp.maximum(acc + b2_ref[...], 0.0)

    # ---- maxpool 2x2 #2 --------------------------------------> (4, 4*8)
    h = jnp.maximum(jnp.dot(rs2_ref[0], h), jnp.dot(rs2_ref[1], h))
    h = jnp.maximum(jnp.dot(h, ps2_ref[0]), jnp.dot(h, ps2_ref[1]))

    # ---- fc4 (128->64) + ReLU (PyTorch C,H,W flatten folded into w4 slabs)
    hb = h.astype(bf16)
    z = jnp.zeros((1, 64), f32)
    for r in range(4):
        z += jnp.dot(hb[r:r + 1, :], w4_ref[r], preferred_element_type=f32)
    z = jnp.maximum(z + b4_ref[...], 0.0)                       # (1, 64)

    # ---- fc5 (64->26) + log_softmax --------------------------> (1, 26)
    logits = jnp.dot(z.astype(bf16), w5_ref[...],
                     preferred_element_type=f32) + b5_ref[...]
    m = jnp.max(logits, axis=1, keepdims=True)
    s = logits - m
    lse = jnp.log(jnp.sum(jnp.exp(s), axis=1, keepdims=True))
    out_ref[0] = (s - lse).astype(out_ref.dtype)


# ----------------------------------------------------------------------------
# Host-side weight preparation (pure XLA, tiny, runs once per call under jit).
# ----------------------------------------------------------------------------
def _conv_band_matrices(w, in_w):
    """PyTorch conv weight (OC, IC, KH, KW) -> (KH, in_w*IC, out_w*OC) banded
    slabs so that one VALID-conv row band is one matmul.  Input lane index is
    x_in*IC + ic, output lane index is x_out*OC + oc."""
    OC, IC, KH, KW = w.shape
    out_w = in_w - KW + 1
    x_in = jnp.arange(in_w)[:, None, None, None]
    ic = jnp.arange(IC)[None, :, None, None]
    x_out = jnp.arange(out_w)[None, None, :, None]
    oc = jnp.arange(OC)[None, None, None, :]
    j = x_in - x_out
    valid = (j >= 0) & (j < KW)
    jc = jnp.clip(j, 0, KW - 1)
    slabs = []
    for kh in range(KH):
        wk = w[:, :, kh, :]                               # (OC, IC, KW)
        vals = jnp.where(valid, wk[oc, ic, jc], 0.0)      # (in_w, IC, out_w, OC)
        slabs.append(vals.reshape(in_w * IC, out_w * OC))
    return jnp.stack(slabs, axis=0)


def _row_pool_selectors(h):
    """(2, h//2, h) one-hot matrices selecting even / odd rows."""
    t = jnp.arange(h // 2)[:, None]
    y = jnp.arange(h)[None, :]
    even = (y == 2 * t).astype(jnp.float32)
    odd = (y == 2 * t + 1).astype(jnp.float32)
    return jnp.stack([even, odd], axis=0)


def _col_pool_selectors(w, c):
    """(2, w*c, (w//2)*c) one-hot matrices selecting even / odd W groups while
    preserving the per-channel lane layout (lane index = x*c + channel)."""
    wo = w // 2
    x_in = jnp.arange(w)[:, None, None, None]
    c_in = jnp.arange(c)[None, :, None, None]
    x_out = jnp.arange(wo)[None, None, :, None]
    c_out = jnp.arange(c)[None, None, None, :]
    same = c_in == c_out
    even = ((x_in == 2 * x_out) & same).astype(jnp.float32).reshape(w * c, wo * c)
    odd = ((x_in == 2 * x_out + 1) & same).astype(jnp.float32).reshape(w * c, wo * c)
    return jnp.stack([even, odd], axis=0)


def _resident(a):
    """Full-array block with a constant index map -> stays VMEM-resident."""
    nd = a.ndim
    return pl.BlockSpec(a.shape, lambda i, _nd=nd: (0,) * _nd)


def _fused_forward(x3, wb1, b1t, rs1, ps1, wb2, b2t, rs2, ps2,
                   w4p, b4r, w5p, b5r):
    n = x3.shape[0]
    args = (x3, wb1, b1t, rs1, ps1, wb2, b2t, rs2, ps2, w4p, b4r, w5p, b5r)
    in_specs = [pl.BlockSpec((1, 28, 28), lambda i: (i, 0, 0))]
    in_specs += [_resident(a) for a in args[1:]]
    out = pl.pallas_call(
        _lenet_kernel,
        out_shape=jax.ShapeDtypeStruct((n, 1, 26), jnp.float32),
        grid=(n,),
        in_specs=in_specs,
        out_specs=pl.BlockSpec((1, 1, 26), lambda i: (i, 0, 0)),
        compiler_params=pltpu.CompilerParams(
            dimension_semantics=("parallel",)),
    )(*args)
    return out.reshape(n, 26)


# ----------------------------------------------------------------------------
# Model (params kept in PyTorch conventions: conv (OC,IC,KH,KW), fc (out,in))
# ----------------------------------------------------------------------------
def init_params(key):
    ks = jax.random.split(key, 8)
    s = 0.1
    return dict(
        conv1_w=jax.random.normal(ks[0], (8, 1, 5, 5), jnp.float32) * s,
        conv1_b=jax.random.normal(ks[1], (8,), jnp.float32) * s,
        conv2_w=jax.random.normal(ks[2], (8, 8, 5, 5), jnp.float32) * s,
        conv2_b=jax.random.normal(ks[3], (8,), jnp.float32) * s,
        fc4_w=jax.random.normal(ks[4], (64, 128), jnp.float32) * s,
        fc4_b=jax.random.normal(ks[5], (64,), jnp.float32) * s,
        fc5_w=jax.random.normal(ks[6], (26, 64), jnp.float32) * s,
        fc5_b=jax.random.normal(ks[7], (26,), jnp.float32) * s,
    )


@jax.jit
def my_model_forward(params, x):
    """x: (N, 1, 28, 28) float32 -> (N, 26) log-probs."""
    n = x.shape[0]
    x3 = x.reshape(n, 28, 28).astype(jnp.float32)

    bf16 = jnp.bfloat16
    wb1 = _conv_band_matrices(params["conv1_w"], 28).astype(bf16)   # (5, 28, 192)
    wb2 = _conv_band_matrices(params["conv2_w"], 12).astype(bf16)   # (5, 96, 64)
    b1t = jnp.tile(params["conv1_b"], 24)[None, :]                  # (1, 192)
    b2t = jnp.tile(params["conv2_b"], 8)[None, :]                   # (1, 64)
    rs1 = _row_pool_selectors(24)                                   # (2, 12, 24)
    ps1 = _col_pool_selectors(24, 8)                                # (2, 192, 96)
    rs2 = _row_pool_selectors(8)                                    # (2, 4, 8)
    ps2 = _col_pool_selectors(8, 8)                                 # (2, 64, 32)
    # Fold PyTorch's (C, H, W) flatten order into per-row fc4 weight slabs.
    w4p = (params["fc4_w"].reshape(64, 8, 4, 4)      # (n, c, h, w)
           .transpose(2, 3, 1, 0)                    # (h, w, c, n)
           .reshape(4, 32, 64).astype(bf16))
    w5p = params["fc5_w"].T.astype(bf16)             # (64, 26)
    b4r = params["fc4_b"][None, :]                   # (1, 64)
    b5r = params["fc5_b"][None, :]                   # (1, 26)

    return _fused_forward(x3, wb1, b1t, rs1, ps1, wb2, b2t, rs2, ps2,
                          w4p, b4r, w5p, b5r)


# ----------------------------------------------------------------------------
# Pure-JAX reference (matches the PyTorch module) for a correctness check.
# ----------------------------------------------------------------------------
def _reference_forward(params, x):
    dn = ("NCHW", "OIHW", "NCHW")
    h = jax.lax.conv_general_dilated(x, params["conv1_w"], (1, 1), "VALID",
                                     dimension_numbers=dn)
    h = jax.nn.relu(h + params["conv1_b"][None, :, None, None])
    h = jax.lax.reduce_window(h, -jnp.inf, jax.lax.max,
                              (1, 1, 2, 2), (1, 1, 2, 2), "VALID")
    h = jax.lax.conv_general_dilated(h, params["conv2_w"], (1, 1), "VALID",
                                     dimension_numbers=dn)
    h = jax.nn.relu(h + params["conv2_b"][None, :, None, None])
    h = jax.lax.reduce_window(h, -jnp.inf, jax.lax.max,
                              (1, 1, 2, 2), (1, 1, 2, 2), "VALID")
    h = h.reshape(h.shape[0], -1)
    h = jax.nn.relu(h @ params["fc4_w"].T + params["fc4_b"])
    logits = h @ params["fc5_w"].T + params["fc5_b"]
    return jax.nn.log_softmax(logits, axis=-1)


if __name__ == "__main__":
    key = jax.random.PRNGKey(0)
    pkey, xkey = jax.random.split(key)
    params = init_params(pkey)
    x = jax.random.normal(xkey, (2, 1, 28, 28), jnp.float32)

    out = my_model_forward(params, x)
    out = jax.block_until_ready(out)

    assert out.shape == (2, 26)
    # log_softmax rows must sum to ~1 in probability space
    assert jnp.allclose(jnp.sum(jnp.exp(out), axis=1), 1.0, atol=1e-4)

    # loose tolerance: kernel runs the matmuls in bf16 with f32 accumulation
    ref = _reference_forward(params, x)
    max_err = float(jnp.max(jnp.abs(out - ref)))
    assert max_err < 1e-1, f"mismatch vs reference: {max_err}"

    print("KERNEL_OK")
</pallas_src>

<mosaic_0001>
module attributes {stable_mosaic.version = 11 : i64} {
  func.func @_lenet_kernel(%arg0: i32, %arg1: memref<1x28x28xf32, #tpu.memory_space<vmem>>, %arg2: memref<5x28x192xbf16, #tpu.memory_space<vmem>>, %arg3: memref<1x192xf32, #tpu.memory_space<vmem>>, %arg4: memref<2x12x24xf32, #tpu.memory_space<vmem>>, %arg5: memref<2x192x96xf32, #tpu.memory_space<vmem>>, %arg6: memref<5x96x64xbf16, #tpu.memory_space<vmem>>, %arg7: memref<1x64xf32, #tpu.memory_space<vmem>>, %arg8: memref<2x4x8xf32, #tpu.memory_space<vmem>>, %arg9: memref<2x64x32xf32, #tpu.memory_space<vmem>>, %arg10: memref<4x32x64xbf16, #tpu.memory_space<vmem>>, %arg11: memref<1x64xf32, #tpu.memory_space<vmem>>, %arg12: memref<64x26xbf16, #tpu.memory_space<vmem>>, %arg13: memref<1x26xf32, #tpu.memory_space<vmem>>, %arg14: memref<1x1x26xf32, #tpu.memory_space<vmem>>) attributes {dimension_semantics = [#tpu.dimension_semantics<parallel>], iteration_bounds = array<i64: 2>, scalar_prefetch = 0 : i64, scratch_operands = 0 : i64, tpu.core_type = #tpu.core_type<tc>, window_params = [{transform_indices = @transform_0, window_bounds = array<i64: 1, 28, 28>}, {pipeline_mode = #tpu.pipeline_mode<synchronous>, transform_indices = @transform_1, window_bounds = array<i64: 5, 28, 192>}, {pipeline_mode = #tpu.pipeline_mode<synchronous>, transform_indices = @transform_2, window_bounds = array<i64: 1, 192>}, {pipeline_mode = #tpu.pipeline_mode<synchronous>, transform_indices = @transform_3, window_bounds = array<i64: 2, 12, 24>}, {pipeline_mode = #tpu.pipeline_mode<synchronous>, transform_indices = @transform_4, window_bounds = array<i64: 2, 192, 96>}, {pipeline_mode = #tpu.pipeline_mode<synchronous>, transform_indices = @transform_5, window_bounds = array<i64: 5, 96, 64>}, {pipeline_mode = #tpu.pipeline_mode<synchronous>, transform_indices = @transform_6, window_bounds = array<i64: 1, 64>}, {pipeline_mode = #tpu.pipeline_mode<synchronous>, transform_indices = @transform_7, window_bounds = array<i64: 2, 4, 8>}, {pipeline_mode = #tpu.pipeline_mode<synchronous>, transform_indices = @transform_8, window_bounds = array<i64: 2, 64, 32>}, {pipeline_mode = #tpu.pipeline_mode<synchronous>, transform_indices = @transform_9, window_bounds = array<i64: 4, 32, 64>}, {pipeline_mode = #tpu.pipeline_mode<synchronous>, transform_indices = @transform_10, window_bounds = array<i64: 1, 64>}, {pipeline_mode = #tpu.pipeline_mode<synchronous>, transform_indices = @transform_11, window_bounds = array<i64: 64, 26>}, {pipeline_mode = #tpu.pipeline_mode<synchronous>, transform_indices = @transform_12, window_bounds = array<i64: 1, 26>}, {transform_indices = @transform_13, window_bounds = array<i64: 1, 1, 26>}]} {
    %c0 = arith.constant 0 : index
    %c0_0 = arith.constant 0 : index
    %c0_1 = arith.constant 0 : index
    %0 = vector.load %arg1[%c0, %c0_0, %c0_1] : memref<1x28x28xf32, #tpu.memory_space<vmem>>, vector<1x28x28xf32>
    %1 = vector.shape_cast %0 : vector<1x28x28xf32> to vector<28x28xf32>
    %2 = arith.truncf %1 : vector<28x28xf32> to vector<28x28xbf16>
    %cst = arith.constant 0.000000e+00 : f32
    %3 = vector.broadcast %cst : f32 to vector<24x192xf32>
    %4 = vector.extract_strided_slice %2 {offsets = [0, 0], sizes = [24, 28], strides = [1, 1]} : vector<28x28xbf16> to vector<24x28xbf16>
    %c0_2 = arith.constant 0 : index
    %c0_3 = arith.constant 0 : index
    %c0_4 = arith.constant 0 : index
    %5 = vector.load %arg2[%c0_2, %c0_3, %c0_4] : memref<5x28x192xbf16, #tpu.memory_space<vmem>>, vector<1x28x192xbf16>
    %6 = vector.shape_cast %5 : vector<1x28x192xbf16> to vector<28x192xbf16>
    %cst_5 = arith.constant dense<0.000000e+00> : vector<24x192xf32>
    %7 = tpu.matmul %4, %6, %cst_5 {dimension_numbers = #tpu.dot_dimension_numbers<[1], [0], [0], [1], [0, 0, 1, 1], [], []>} : vector<24x28xbf16>, vector<28x192xbf16>, vector<24x192xf32> -> vector<24x192xf32>
    %8 = arith.addf %3, %7 : vector<24x192xf32>
    %9 = vector.extract_strided_slice %2 {offsets = [1, 0], sizes = [24, 28], strides = [1, 1]} : vector<28x28xbf16> to vector<24x28xbf16>
    %c1 = arith.constant 1 : index
    %c0_6 = arith.constant 0 : index
    %c0_7 = arith.constant 0 : index
    %10 = vector.load %arg2[%c1, %c0_6, %c0_7] : memref<5x28x192xbf16, #tpu.memory_space<vmem>>, vector<1x28x192xbf16>
    %11 = vector.shape_cast %10 : vector<1x28x192xbf16> to vector<28x192xbf16>
    %cst_8 = arith.constant dense<0.000000e+00> : vector<24x192xf32>
    %12 = tpu.matmul %9, %11, %cst_8 {dimension_numbers = #tpu.dot_dimension_numbers<[1], [0], [0], [1], [0, 0, 1, 1], [], []>} : vector<24x28xbf16>, vector<28x192xbf16>, vector<24x192xf32> -> vector<24x192xf32>
    %13 = arith.addf %8, %12 : vector<24x192xf32>
    %14 = vector.extract_strided_slice %2 {offsets = [2, 0], sizes = [24, 28], strides = [1, 1]} : vector<28x28xbf16> to vector<24x28xbf16>
    %c2 = arith.constant 2 : index
    %c0_9 = arith.constant 0 : index
    %c0_10 = arith.constant 0 : index
    %15 = vector.load %arg2[%c2, %c0_9, %c0_10] : memref<5x28x192xbf16, #tpu.memory_space<vmem>>, vector<1x28x192xbf16>
    %16 = vector.shape_cast %15 : vector<1x28x192xbf16> to vector<28x192xbf16>
    %cst_11 = arith.constant dense<0.000000e+00> : vector<24x192xf32>
    %17 = tpu.matmul %14, %16, %cst_11 {dimension_numbers = #tpu.dot_dimension_numbers<[1], [0], [0], [1], [0, 0, 1, 1], [], []>} : vector<24x28xbf16>, vector<28x192xbf16>, vector<24x192xf32> -> vector<24x192xf32>
    %18 = arith.addf %13, %17 : vector<24x192xf32>
    %19 = vector.extract_strided_slice %2 {offsets = [3, 0], sizes = [24, 28], strides = [1, 1]} : vector<28x28xbf16> to vector<24x28xbf16>
    %c3 = arith.constant 3 : index
    %c0_12 = arith.constant 0 : index
    %c0_13 = arith.constant 0 : index
    %20 = vector.load %arg2[%c3, %c0_12, %c0_13] : memref<5x28x192xbf16, #tpu.memory_space<vmem>>, vector<1x28x192xbf16>
    %21 = vector.shape_cast %20 : vector<1x28x192xbf16> to vector<28x192xbf16>
    %cst_14 = arith.constant dense<0.000000e+00> : vector<24x192xf32>
    %22 = tpu.matmul %19, %21, %cst_14 {dimension_numbers = #tpu.dot_dimension_numbers<[1], [0], [0], [1], [0, 0, 1, 1], [], []>} : vector<24x28xbf16>, vector<28x192xbf16>, vector<24x192xf32> -> vector<24x192xf32>
    %23 = arith.addf %18, %22 : vector<24x192xf32>
    %24 = vector.extract_strided_slice %2 {offsets = [4, 0], sizes = [24, 28], strides = [1, 1]} : vector<28x28xbf16> to vector<24x28xbf16>
    %c4 = arith.constant 4 : index
    %c0_15 = arith.constant 0 : index
    %c0_16 = arith.constant 0 : index
    %25 = vector.load %arg2[%c4, %c0_15, %c0_16] : memref<5x28x192xbf16, #tpu.memory_space<vmem>>, vector<1x28x192xbf16>
    %26 = vector.shape_cast %25 : vector<1x28x192xbf16> to vector<28x192xbf16>
    %cst_17 = arith.constant dense<0.000000e+00> : vector<24x192xf32>
    %27 = tpu.matmul %24, %26, %cst_17 {dimension_numbers = #tpu.dot_dimension_numbers<[1], [0], [0], [1], [0, 0, 1, 1], [], []>} : vector<24x28xbf16>, vector<28x192xbf16>, vector<24x192xf32> -> vector<24x192xf32>
    %28 = arith.addf %23, %27 : vector<24x192xf32>
    %c0_18 = arith.constant 0 : index
    %c0_19 = arith.constant 0 : index
    %29 = vector.load %arg3[%c0_18, %c0_19] : memref<1x192xf32, #tpu.memory_space<vmem>>, vector<1x192xf32>
    %30 = vector.broadcast %29 : vector<1x192xf32> to vector<24x192xf32>
    %31 = arith.addf %28, %30 : vector<24x192xf32>
    %cst_20 = arith.constant 0.000000e+00 : f32
    %32 = vector.broadcast %cst_20 : f32 to vector<24x192xf32>
    %33 = arith.maximumf %31, %32 : vector<24x192xf32>
    %c0_21 = arith.constant 0 : index
    %c0_22 = arith.constant 0 : index
    %c0_23 = arith.constant 0 : index
    %34 = vector.load %arg4[%c0_21, %c0_22, %c0_23] : memref<2x12x24xf32, #tpu.memory_space<vmem>>, vector<1x12x24xf32>
    %35 = vector.shape_cast %34 : vector<1x12x24xf32> to vector<12x24xf32>
    %cst_24 = arith.constant dense<0.000000e+00> : vector<12x192xf32>
    %36 = tpu.matmul %35, %33, %cst_24 {dimension_numbers = #tpu.dot_dimension_numbers<[1], [0], [0], [1], [0, 0, 1, 1], [], []>} : vector<12x24xf32>, vector<24x192xf32>, vector<12x192xf32> -> vector<12x192xf32>
    %c1_25 = arith.constant 1 : index
    %c0_26 = arith.constant 0 : index
    %c0_27 = arith.constant 0 : index
    %37 = vector.load %arg4[%c1_25, %c0_26, %c0_27] : memref<2x12x24xf32, #tpu.memory_space<vmem>>, vector<1x12x24xf32>
    %38 = vector.shape_cast %37 : vector<1x12x24xf32> to vector<12x24xf32>
    %cst_28 = arith.constant dense<0.000000e+00> : vector<12x192xf32>
    %39 = tpu.matmul %38, %33, %cst_28 {dimension_numbers = #tpu.dot_dimension_numbers<[1], [0], [0], [1], [0, 0, 1, 1], [], []>} : vector<12x24xf32>, vector<24x192xf32>, vector<12x192xf32> -> vector<12x192xf32>
    %40 = arith.maximumf %36, %39 : vector<12x192xf32>
    %c0_29 = arith.constant 0 : index
    %c0_30 = arith.constant 0 : index
    %c0_31 = arith.constant 0 : index
    %41 = vector.load %arg5[%c0_29, %c0_30, %c0_31] : memref<2x192x96xf32, #tpu.memory_space<vmem>>, vector<1x192x96xf32>
    %42 = vector.shape_cast %41 : vector<1x192x96xf32> to vector<192x96xf32>
    %cst_32 = arith.constant dense<0.000000e+00> : vector<12x96xf32>
    %43 = tpu.matmul %40, %42, %cst_32 {dimension_numbers = #tpu.dot_dimension_numbers<[1], [0], [0], [1], [0, 0, 1, 1], [], []>} : vector<12x192xf32>, vector<192x96xf32>, vector<12x96xf32> -> vector<12x96xf32>
    %c1_33 = arith.constant 1 : index
    %c0_34 = arith.constant 0 : index
    %c0_35 = arith.constant 0 : index
    %44 = vector.load %arg5[%c1_33, %c0_34, %c0_35] : memref<2x192x96xf32, #tpu.memory_space<vmem>>, vector<1x192x96xf32>
    %45 = vector.shape_cast %44 : vector<1x192x96xf32> to vector<192x96xf32>
    %cst_36 = arith.constant dense<0.000000e+00> : vector<12x96xf32>
    %46 = tpu.matmul %40, %45, %cst_36 {dimension_numbers = #tpu.dot_dimension_numbers<[1], [0], [0], [1], [0, 0, 1, 1], [], []>} : vector<12x192xf32>, vector<192x96xf32>, vector<12x96xf32> -> vector<12x96xf32>
    %47 = arith.maximumf %43, %46 : vector<12x96xf32>
    %48 = arith.truncf %47 : vector<12x96xf32> to vector<12x96xbf16>
    %cst_37 = arith.constant 0.000000e+00 : f32
    %49 = vector.broadcast %cst_37 : f32 to vector<8x64xf32>
    %50 = vector.extract_strided_slice %48 {offsets = [0, 0], sizes = [8, 96], strides = [1, 1]} : vector<12x96xbf16> to vector<8x96xbf16>
    %c0_38 = arith.constant 0 : index
    %c0_39 = arith.constant 0 : index
    %c0_40 = arith.constant 0 : index
    %51 = vector.load %arg6[%c0_38, %c0_39, %c0_40] : memref<5x96x64xbf16, #tpu.memory_space<vmem>>, vector<1x96x64xbf16>
    %52 = vector.shape_cast %51 : vector<1x96x64xbf16> to vector<96x64xbf16>
    %cst_41 = arith.constant dense<0.000000e+00> : vector<8x64xf32>
    %53 = tpu.matmul %50, %52, %cst_41 {dimension_numbers = #tpu.dot_dimension_numbers<[1], [0], [0], [1], [0, 0, 1, 1], [], []>} : vector<8x96xbf16>, vector<96x64xbf16>, vector<8x64xf32> -> vector<8x64xf32>
    %54 = arith.addf %49, %53 : vector<8x64xf32>
    %55 = vector.extract_strided_slice %48 {offsets = [1, 0], sizes = [8, 96], strides = [1, 1]} : vector<12x96xbf16> to vector<8x96xbf16>
    %c1_42 = arith.constant 1 : index
    %c0_43 = arith.constant 0 : index
    %c0_44 = arith.constant 0 : index
    %56 = vector.load %arg6[%c1_42, %c0_43, %c0_44] : memref<5x96x64xbf16, #tpu.memory_space<vmem>>, vector<1x96x64xbf16>
    %57 = vector.shape_cast %56 : vector<1x96x64xbf16> to vector<96x64xbf16>
    %cst_45 = arith.constant dense<0.000000e+00> : vector<8x64xf32>
    %58 = tpu.matmul %55, %57, %cst_45 {dimension_numbers = #tpu.dot_dimension_numbers<[1], [0], [0], [1], [0, 0, 1, 1], [], []>} : vector<8x96xbf16>, vector<96x64xbf16>, vector<8x64xf32> -> vector<8x64xf32>
    %59 = arith.addf %54, %58 : vector<8x64xf32>
    %60 = vector.extract_strided_slice %48 {offsets = [2, 0], sizes = [8, 96], strides = [1, 1]} : vector<12x96xbf16> to vector<8x96xbf16>
    %c2_46 = arith.constant 2 : index
    %c0_47 = arith.constant 0 : index
    %c0_48 = arith.constant 0 : index
    %61 = vector.load %arg6[%c2_46, %c0_47, %c0_48] : memref<5x96x64xbf16, #tpu.memory_space<vmem>>, vector<1x96x64xbf16>
    %62 = vector.shape_cast %61 : vector<1x96x64xbf16> to vector<96x64xbf16>
    %cst_49 = arith.constant dense<0.000000e+00> : vector<8x64xf32>
    %63 = tpu.matmul %60, %62, %cst_49 {dimension_numbers = #tpu.dot_dimension_numbers<[1], [0], [0], [1], [0, 0, 1, 1], [], []>} : vector<8x96xbf16>, vector<96x64xbf16>, vector<8x64xf32> -> vector<8x64xf32>
    %64 = arith.addf %59, %63 : vector<8x64xf32>
    %65 = vector.extract_strided_slice %48 {offsets = [3, 0], sizes = [8, 96], strides = [1, 1]} : vector<12x96xbf16> to vector<8x96xbf16>
    %c3_50 = arith.constant 3 : index
    %c0_51 = arith.constant 0 : index
    %c0_52 = arith.constant 0 : index
    %66 = vector.load %arg6[%c3_50, %c0_51, %c0_52] : memref<5x96x64xbf16, #tpu.memory_space<vmem>>, vector<1x96x64xbf16>
    %67 = vector.shape_cast %66 : vector<1x96x64xbf16> to vector<96x64xbf16>
    %cst_53 = arith.constant dense<0.000000e+00> : vector<8x64xf32>
    %68 = tpu.matmul %65, %67, %cst_53 {dimension_numbers = #tpu.dot_dimension_numbers<[1], [0], [0], [1], [0, 0, 1, 1], [], []>} : vector<8x96xbf16>, vector<96x64xbf16>, vector<8x64xf32> -> vector<8x64xf32>
    %69 = arith.addf %64, %68 : vector<8x64xf32>
    %70 = vector.extract_strided_slice %48 {offsets = [4, 0], sizes = [8, 96], strides = [1, 1]} : vector<12x96xbf16> to vector<8x96xbf16>
    %c4_54 = arith.constant 4 : index
    %c0_55 = arith.constant 0 : index
    %c0_56 = arith.constant 0 : index
    %71 = vector.load %arg6[%c4_54, %c0_55, %c0_56] : memref<5x96x64xbf16, #tpu.memory_space<vmem>>, vector<1x96x64xbf16>
    %72 = vector.shape_cast %71 : vector<1x96x64xbf16> to vector<96x64xbf16>
    %cst_57 = arith.constant dense<0.000000e+00> : vector<8x64xf32>
    %73 = tpu.matmul %70, %72, %cst_57 {dimension_numbers = #tpu.dot_dimension_numbers<[1], [0], [0], [1], [0, 0, 1, 1], [], []>} : vector<8x96xbf16>, vector<96x64xbf16>, vector<8x64xf32> -> vector<8x64xf32>
    %74 = arith.addf %69, %73 : vector<8x64xf32>
    %c0_58 = arith.constant 0 : index
    %c0_59 = arith.constant 0 : index
    %75 = vector.load %arg7[%c0_58, %c0_59] : memref<1x64xf32, #tpu.memory_space<vmem>>, vector<1x64xf32>
    %76 = vector.broadcast %75 : vector<1x64xf32> to vector<8x64xf32>
    %77 = arith.addf %74, %76 : vector<8x64xf32>
    %cst_60 = arith.constant 0.000000e+00 : f32
    %78 = vector.broadcast %cst_60 : f32 to vector<8x64xf32>
    %79 = arith.maximumf %77, %78 : vector<8x64xf32>
    %c0_61 = arith.constant 0 : index
    %c0_62 = arith.constant 0 : index
    %c0_63 = arith.constant 0 : index
    %80 = vector.load %arg8[%c0_61, %c0_62, %c0_63] : memref<2x4x8xf32, #tpu.memory_space<vmem>>, vector<1x4x8xf32>
    %81 = vector.shape_cast %80 : vector<1x4x8xf32> to vector<4x8xf32>
    %cst_64 = arith.constant dense<0.000000e+00> : vector<4x64xf32>
    %82 = tpu.matmul %81, %79, %cst_64 {dimension_numbers = #tpu.dot_dimension_numbers<[1], [0], [0], [1], [0, 0, 1, 1], [], []>} : vector<4x8xf32>, vector<8x64xf32>, vector<4x64xf32> -> vector<4x64xf32>
    %c1_65 = arith.constant 1 : index
    %c0_66 = arith.constant 0 : index
    %c0_67 = arith.constant 0 : index
    %83 = vector.load %arg8[%c1_65, %c0_66, %c0_67] : memref<2x4x8xf32, #tpu.memory_space<vmem>>, vector<1x4x8xf32>
    %84 = vector.shape_cast %83 : vector<1x4x8xf32> to vector<4x8xf32>
    %cst_68 = arith.constant dense<0.000000e+00> : vector<4x64xf32>
    %85 = tpu.matmul %84, %79, %cst_68 {dimension_numbers = #tpu.dot_dimension_numbers<[1], [0], [0], [1], [0, 0, 1, 1], [], []>} : vector<4x8xf32>, vector<8x64xf32>, vector<4x64xf32> -> vector<4x64xf32>
    %86 = arith.maximumf %82, %85 : vector<4x64xf32>
    %c0_69 = arith.constant 0 : index
    %c0_70 = arith.constant 0 : index
    %c0_71 = arith.constant 0 : index
    %87 = vector.load %arg9[%c0_69, %c0_70, %c0_71] : memref<2x64x32xf32, #tpu.memory_space<vmem>>, vector<1x64x32xf32>
    %88 = vector.shape_cast %87 : vector<1x64x32xf32> to vector<64x32xf32>
    %cst_72 = arith.constant dense<0.000000e+00> : vector<4x32xf32>
    %89 = tpu.matmul %86, %88, %cst_72 {dimension_numbers = #tpu.dot_dimension_numbers<[1], [0], [0], [1], [0, 0, 1, 1], [], []>} : vector<4x64xf32>, vector<64x32xf32>, vector<4x32xf32> -> vector<4x32xf32>
    %c1_73 = arith.constant 1 : index
    %c0_74 = arith.constant 0 : index
    %c0_75 = arith.constant 0 : index
    %90 = vector.load %arg9[%c1_73, %c0_74, %c0_75] : memref<2x64x32xf32, #tpu.memory_space<vmem>>, vector<1x64x32xf32>
    %91 = vector.shape_cast %90 : vector<1x64x32xf32> to vector<64x32xf32>
    %cst_76 = arith.constant dense<0.000000e+00> : vector<4x32xf32>
    %92 = tpu.matmul %86, %91, %cst_76 {dimension_numbers = #tpu.dot_dimension_numbers<[1], [0], [0], [1], [0, 0, 1, 1], [], []>} : vector<4x64xf32>, vector<64x32xf32>, vector<4x32xf32> -> vector<4x32xf32>
    %93 = arith.maximumf %89, %92 : vector<4x32xf32>
    %94 = arith.truncf %93 : vector<4x32xf32> to vector<4x32xbf16>
    %cst_77 = arith.constant 0.000000e+00 : f32
    %95 = vector.broadcast %cst_77 : f32 to vector<1x64xf32>
    %96 = vector.extract_strided_slice %94 {offsets = [0, 0], sizes = [1, 32], strides = [1, 1]} : vector<4x32xbf16> to vector<1x32xbf16>
    %c0_78 = arith.constant 0 : index
    %c0_79 = arith.constant 0 : index
    %c0_80 = arith.constant 0 : index
    %97 = vector.load %arg10[%c0_78, %c0_79, %c0_80] : memref<4x32x64xbf16, #tpu.memory_space<vmem>>, vector<1x32x64xbf16>
    %98 = vector.shape_cast %97 : vector<1x32x64xbf16> to vector<32x64xbf16>
    %cst_81 = arith.constant dense<0.000000e+00> : vector<1x64xf32>
    %99 = tpu.matmul %96, %98, %cst_81 {dimension_numbers = #tpu.dot_dimension_numbers<[1], [0], [0], [1], [0, 0, 1, 1], [], []>} : vector<1x32xbf16>, vector<32x64xbf16>, vector<1x64xf32> -> vector<1x64xf32>
    %100 = arith.addf %95, %99 : vector<1x64xf32>
    %101 = vector.extract_strided_slice %94 {offsets = [1, 0], sizes = [1, 32], strides = [1, 1]} : vector<4x32xbf16> to vector<1x32xbf16>
    %c1_82 = arith.constant 1 : index
    %c0_83 = arith.constant 0 : index
    %c0_84 = arith.constant 0 : index
    %102 = vector.load %arg10[%c1_82, %c0_83, %c0_84] : memref<4x32x64xbf16, #tpu.memory_space<vmem>>, vector<1x32x64xbf16>
    %103 = vector.shape_cast %102 : vector<1x32x64xbf16> to vector<32x64xbf16>
    %cst_85 = arith.constant dense<0.000000e+00> : vector<1x64xf32>
    %104 = tpu.matmul %101, %103, %cst_85 {dimension_numbers = #tpu.dot_dimension_numbers<[1], [0], [0], [1], [0, 0, 1, 1], [], []>} : vector<1x32xbf16>, vector<32x64xbf16>, vector<1x64xf32> -> vector<1x64xf32>
    %105 = arith.addf %100, %104 : vector<1x64xf32>
    %106 = vector.extract_strided_slice %94 {offsets = [2, 0], sizes = [1, 32], strides = [1, 1]} : vector<4x32xbf16> to vector<1x32xbf16>
    %c2_86 = arith.constant 2 : index
    %c0_87 = arith.constant 0 : index
    %c0_88 = arith.constant 0 : index
    %107 = vector.load %arg10[%c2_86, %c0_87, %c0_88] : memref<4x32x64xbf16, #tpu.memory_space<vmem>>, vector<1x32x64xbf16>
    %108 = vector.shape_cast %107 : vector<1x32x64xbf16> to vector<32x64xbf16>
    %cst_89 = arith.constant dense<0.000000e+00> : vector<1x64xf32>
    %109 = tpu.matmul %106, %108, %cst_89 {dimension_numbers = #tpu.dot_dimension_numbers<[1], [0], [0], [1], [0, 0, 1, 1], [], []>} : vector<1x32xbf16>, vector<32x64xbf16>, vector<1x64xf32> -> vector<1x64xf32>
    %110 = arith.addf %105, %109 : vector<1x64xf32>
    %111 = vector.extract_strided_slice %94 {offsets = [3, 0], sizes = [1, 32], strides = [1, 1]} : vector<4x32xbf16> to vector<1x32xbf16>
    %c3_90 = arith.constant 3 : index
    %c0_91 = arith.constant 0 : index
    %c0_92 = arith.constant 0 : index
    %112 = vector.load %arg10[%c3_90, %c0_91, %c0_92] : memref<4x32x64xbf16, #tpu.memory_space<vmem>>, vector<1x32x64xbf16>
    %113 = vector.shape_cast %112 : vector<1x32x64xbf16> to vector<32x64xbf16>
    %cst_93 = arith.constant dense<0.000000e+00> : vector<1x64xf32>
    %114 = tpu.matmul %111, %113, %cst_93 {dimension_numbers = #tpu.dot_dimension_numbers<[1], [0], [0], [1], [0, 0, 1, 1], [], []>} : vector<1x32xbf16>, vector<32x64xbf16>, vector<1x64xf32> -> vector<1x64xf32>
    %115 = arith.addf %110, %114 : vector<1x64xf32>
    %c0_94 = arith.constant 0 : index
    %c0_95 = arith.constant 0 : index
    %116 = vector.load %arg11[%c0_94, %c0_95] : memref<1x64xf32, #tpu.memory_space<vmem>>, vector<1x64xf32>
    %117 = arith.addf %115, %116 : vector<1x64xf32>
    %cst_96 = arith.constant 0.000000e+00 : f32
    %118 = vector.broadcast %cst_96 : f32 to vector<1x64xf32>
    %119 = arith.maximumf %117, %118 : vector<1x64xf32>
    %120 = arith.truncf %119 : vector<1x64xf32> to vector<1x64xbf16>
    %c0_97 = arith.constant 0 : index
    %c0_98 = arith.constant 0 : index
    %121 = vector.load %arg12[%c0_97, %c0_98] : memref<64x26xbf16, #tpu.memory_space<vmem>>, vector<64x26xbf16>
    %cst_99 = arith.constant dense<0.000000e+00> : vector<1x26xf32>
    %122 = tpu.matmul %120, %121, %cst_99 {dimension_numbers = #tpu.dot_dimension_numbers<[1], [0], [0], [1], [0, 0, 1, 1], [], []>} : vector<1x64xbf16>, vector<64x26xbf16>, vector<1x26xf32> -> vector<1x26xf32>
    %c0_100 = arith.constant 0 : index
    %c0_101 = arith.constant 0 : index
    %123 = vector.load %arg13[%c0_100, %c0_101] : memref<1x26xf32, #tpu.memory_space<vmem>>, vector<1x26xf32>
    %124 = arith.addf %122, %123 : vector<1x26xf32>
    %cst_102 = arith.constant dense<0xFF800000> : vector<1xf32>
    %125 = vector.multi_reduction <maximumf>, %124, %cst_102 [1] : vector<1x26xf32> to vector<1xf32>
    %126 = vector.shape_cast %125 : vector<1xf32> to vector<1x1xf32>
    %127 = vector.broadcast %126 : vector<1x1xf32> to vector<1x26xf32>
    %128 = arith.subf %124, %127 : vector<1x26xf32>
    %129 = math.exp %128 : vector<1x26xf32>
    %cst_103 = arith.constant dense<0.000000e+00> : vector<1xf32>
    %130 = vector.multi_reduction <add>, %129, %cst_103 [1] : vector<1x26xf32> to vector<1xf32>
    %131 = vector.shape_cast %130 : vector<1xf32> to vector<1x1xf32>
    %132 = math.log %131 : vector<1x1xf32>
    %133 = vector.broadcast %132 : vector<1x1xf32> to vector<1x26xf32>
    %134 = arith.subf %128, %133 : vector<1x26xf32>
    %c0_104 = arith.constant 0 : index
    %c0_105 = arith.constant 0 : index
    %c0_106 = arith.constant 0 : index
    %135 = vector.load %arg14[%c0_104, %c0_105, %c0_106] : memref<1x1x26xf32, #tpu.memory_space<vmem>>, vector<1x1x26xf32>
    %136 = vector.shape_cast %135 : vector<1x1x26xf32> to vector<1x26xf32>
    %137 = vector.shape_cast %134 : vector<1x26xf32> to vector<1x1x26xf32>
    tpu.vector_store %arg14[%c0_104, %c0_105, %c0_106], %137 {strides = array<i32>} : memref<1x1x26xf32, #tpu.memory_space<vmem>>, vector<1x1x26xf32>,
    return
  }
  func.func @transform_0(%arg0: i32) -> (i32, i32, i32) {
    %c0_i32 = arith.constant 0 : i32
    %c0_i32_0 = arith.constant 0 : i32
    %c0_i32_1 = arith.constant 0 : i32
    return %arg0, %c0_i32, %c0_i32_0 : i32, i32, i32
  }
  func.func @transform_1(%arg0: i32) -> (i32, i32, i32) {
    %c0_i32 = arith.constant 0 : i32
    %c0_i32_0 = arith.constant 0 : i32
    %c0_i32_1 = arith.constant 0 : i32
    %c0_i32_2 = arith.constant 0 : i32
    return %c0_i32, %c0_i32_0, %c0_i32_1 : i32, i32, i32
  }
  func.func @transform_2(%arg0: i32) -> (i32, i32) {
    %c0_i32 = arith.constant 0 : i32
    %c0_i32_0 = arith.constant 0 : i32
    %c0_i32_1 = arith.constant 0 : i32
    return %c0_i32, %c0_i32_0 : i32, i32
  }
  func.func @transform_3(%arg0: i32) -> (i32, i32, i32) {
    %c0_i32 = arith.constant 0 : i32
    %c0_i32_0 = arith.constant 0 : i32
    %c0_i32_1 = arith.constant 0 : i32
    %c0_i32_2 = arith.constant 0 : i32
    return %c0_i32, %c0_i32_0, %c0_i32_1 : i32, i32, i32
  }
  func.func @transform_4(%arg0: i32) -> (i32, i32, i32) {
    %c0_i32 = arith.constant 0 : i32
    %c0_i32_0 = arith.constant 0 : i32
    %c0_i32_1 = arith.constant 0 : i32
    %c0_i32_2 = arith.constant 0 : i32
    return %c0_i32, %c0_i32_0, %c0_i32_1 : i32, i32, i32
  }
  func.func @transform_5(%arg0: i32) -> (i32, i32, i32) {
    %c0_i32 = arith.constant 0 : i32
    %c0_i32_0 = arith.constant 0 : i32
    %c0_i32_1 = arith.constant 0 : i32
    %c0_i32_2 = arith.constant 0 : i32
    return %c0_i32, %c0_i32_0, %c0_i32_1 : i32, i32, i32
  }
  func.func @transform_6(%arg0: i32) -> (i32, i32) {
    %c0_i32 = arith.constant 0 : i32
    %c0_i32_0 = arith.constant 0 : i32
    %c0_i32_1 = arith.constant 0 : i32
    return %c0_i32, %c0_i32_0 : i32, i32
  }
  func.func @transform_7(%arg0: i32) -> (i32, i32, i32) {
    %c0_i32 = arith.constant 0 : i32
    %c0_i32_0 = arith.constant 0 : i32
    %c0_i32_1 = arith.constant 0 : i32
    %c0_i32_2 = arith.constant 0 : i32
    return %c0_i32, %c0_i32_0, %c0_i32_1 : i32, i32, i32
  }
  func.func @transform_8(%arg0: i32) -> (i32, i32, i32) {
    %c0_i32 = arith.constant 0 : i32
    %c0_i32_0 = arith.constant 0 : i32
    %c0_i32_1 = arith.constant 0 : i32
    %c0_i32_2 = arith.constant 0 : i32
    return %c0_i32, %c0_i32_0, %c0_i32_1 : i32, i32, i32
  }
  func.func @transform_9(%arg0: i32) -> (i32, i32, i32) {
    %c0_i32 = arith.constant 0 : i32
    %c0_i32_0 = arith.constant 0 : i32
    %c0_i32_1 = arith.constant 0 : i32
    %c0_i32_2 = arith.constant 0 : i32
    return %c0_i32, %c0_i32_0, %c0_i32_1 : i32, i32, i32
  }
  func.func @transform_10(%arg0: i32) -> (i32, i32) {
    %c0_i32 = arith.constant 0 : i32
    %c0_i32_0 = arith.constant 0 : i32
    %c0_i32_1 = arith.constant 0 : i32
    return %c0_i32, %c0_i32_0 : i32, i32
  }
  func.func @transform_11(%arg0: i32) -> (i32, i32) {
    %c0_i32 = arith.constant 0 : i32
    %c0_i32_0 = arith.constant 0 : i32
    %c0_i32_1 = arith.constant 0 : i32
    return %c0_i32, %c0_i32_0 : i32, i32
  }
  func.func @transform_12(%arg0: i32) -> (i32, i32) {
    %c0_i32 = arith.constant 0 : i32
    %c0_i32_0 = arith.constant 0 : i32
    %c0_i32_1 = arith.constant 0 : i32
    return %c0_i32, %c0_i32_0 : i32, i32
  }
  func.func @transform_13(%arg0: i32) -> (i32, i32, i32) {
    %c0_i32 = arith.constant 0 : i32
    %c0_i32_0 = arith.constant 0 : i32
    %c0_i32_1 = arith.constant 0 : i32
    return %arg0, %c0_i32, %c0_i32_0 : i32, i32, i32
  }
}

</mosaic_0001>

<llo_original>
// kernel: tile.13
$region0: #{tile.13}
  #allocation0 [shape = 's32[1]{0}', space=sflag, size = 0x4, scoped, tag = 'scoped memory for tile.13']
  %s0 = inlined_call_operand.vmem [shape: f32[8], index: 0, kind: input, shape index: {}]
  %s1 = inlined_call_operand.vmem [shape: f32[24,8], index: 1, kind: output, shape index: {}]
  // Predicated region
  $region2: #{tile.13} parent=0 // pred_check
    _
  $region3: #{tile.13} parent=0 // pred_check_branch
    %3 = sbr.rel (0) target = $region5
  $region4: #{tile.13} parent=0 // pred_region
    _
  $region5: #{tile.13} parent=0 // pred_fallthru
    _
  %v4 = vld [vmem:[%s0] ss:$0 sm:$0xff]
  %5 = vst [vmem:[%s1] sm:$0xff] %v4
  %s6 = scalar_lea.vmem %s1, 8
  %7 = vst [vmem:[%s6] sm:$0xff] %v4
  %s8 = scalar_lea.vmem %s1, 16
  %9 = vst [vmem:[%s8] sm:$0xff] %v4

// kernel: tile.14
$region0: #{tile.14}
  %s0 = inlined_call_operand.vmem [shape: f32[24,8], index: 0, kind: input, shape index: {}]
  %s1 = inlined_call_operand.vmem [shape: f32[1,192], index: 1, kind: output, shape index: {}]
  $region1: #{tile.14} parent=0
    #allocation0 [shape = 'u8[8192]{0}', space=vmem, size = 0x2000, scoped, tag = 'scoped mem for output reshape']
    %s2 = smov 3
    %v3 = vld [vmem:[%s0] ss:$16 sm:%s2]
    %vm4 = vcmask 64512
    %5 = vst.msk [vmem:[#allocation0] ss:$8 sm:$0x3] %vm4, %v3
    %s6 = scalar_lea.vmem %s0, 15
    %v7 = vld [vmem:[%s6] sm:$0x1]
    %8 = vrot.lane.b32.xlu0 %v7, 120
    %v9 = vpop.permute.xlu0 %8
    %vm10 = vcmask 1048512
    %11 = vst.msk [vmem:[#allocation0] sm:$0x1] %vm10, %v9
    %s12 = scalar_lea.vmem %s0, 14
    %v13 = vld [vmem:[%s12] sm:$0x1]
    %14 = vrot.lane.b32.xlu0 %v13, 112
    %v15 = vpop.permute.xlu0 %14
    %vm16 = vcmask 982912
    %17 = vst.msk [vmem:[#allocation0] sm:$0x1] %vm16, %v15
    %s18 = scalar_lea.vmem %s0, 13
    %v19 = vld [vmem:[%s18] sm:$0x1]
    %20 = vrot.lane.b32.xlu0 %v19, 104
    %v21 = vpop.permute.xlu0 %20
    %vm22 = vcmask 917312
    %23 = vst.msk [vmem:[#allocation0] sm:$0x1] %vm22, %v21
    %s24 = scalar_lea.vmem %s0, 12
    %v25 = vld [vmem:[%s24] sm:$0x1]
    %26 = vrot.lane.b32.xlu0 %v25, 96
    %v27 = vpop.permute.xlu0 %26
    %vm28 = vcmask 851712
    %29 = vst.msk [vmem:[#allocation0] sm:$0x1] %vm28, %v27
    %s30 = scalar_lea.vmem %s0, 11
    %v31 = vld [vmem:[%s30] sm:$0x1]
    %32 = vrot.lane.b32.xlu0 %v31, 88
    %v33 = vpop.permute.xlu0 %32
    %vm34 = vcmask 786112
    %35 = vst.msk [vmem:[#allocation0] sm:$0x1] %vm34, %v33
    %s36 = scalar_lea.vmem %s0, 10
    %v37 = vld [vmem:[%s36] sm:$0x1]
    %38 = vrot.lane.b32.xlu0 %v37, 80
    %v39 = vpop.permute.xlu0 %38
    %vm40 = vcmask 720512
    %41 = vst.msk [vmem:[#allocation0] sm:$0x1] %vm40, %v39
    %s42 = scalar_lea.vmem %s0, 9
    %v43 = vld [vmem:[%s42] sm:$0x1]
    %44 = vrot.lane.b32.xlu0 %v43, 72
    %v45 = vpop.permute.xlu0 %44
    %vm46 = vcmask 654912
    %47 = vst.msk [vmem:[#allocation0] sm:$0x1] %vm46, %v45
    %s48 = scalar_lea.vmem %s0, 8
    %v49 = vld [vmem:[%s48] sm:$0x1]
    %50 = vrot.lane.b32.xlu0 %v49, 64
    %v51 = vpop.permute.xlu0 %50
    %vm52 = vcmask 589312
    %53 = vst.msk [vmem:[#allocation0] sm:$0x1] %vm52, %v51
    %s54 = scalar_lea.vmem %s0, 7
    %s55 = smov 3
    %v56 = vld [vmem:[%s54] ss:$16 sm:%s55]
    %57 = vrot.lane.b32.xlu0 %v56, 56
    %v58 = vpop.permute.xlu0 %57
    %vm59 = vcmask 523712
    %60 = vst.msk [vmem:[#allocation0] ss:$8 sm:$0x3] %vm59, %v58
    %s61 = scalar_lea.vmem %s0, 6
    %s62 = smov 3
    %v63 = vld [vmem:[%s61] ss:$16 sm:%s62]
    %64 = vrot.lane.b32.xlu0 %v63, 48
    %v65 = vpop.permute.xlu0 %64
    %vm66 = vcmask 458112
    %67 = vst.msk [vmem:[#allocation0] ss:$8 sm:$0x3] %vm66, %v65
    %s68 = scalar_lea.vmem %s0, 5
    %s69 = smov 3
    %v70 = vld [vmem:[%s68] ss:$16 sm:%s69]
    %71 = vrot.lane.b32.xlu0 %v70, 40
    %v72 = vpop.permute.xlu0 %71
    %vm73 = vcmask 392512
    %74 = vst.msk [vmem:[#allocation0] ss:$8 sm:$0x3] %vm73, %v72
    %s75 = scalar_lea.vmem %s0, 4
    %s76 = smov 3
    %v77 = vld [vmem:[%s75] ss:$16 sm:%s76]
    %78 = vrot.lane.b32.xlu0 %v77, 32
    %v79 = vpop.permute.xlu0 %78
    %vm80 = vcmask 326912
    %81 = vst.msk [vmem:[#allocation0] ss:$8 sm:$0x3] %vm80, %v79
    %s82 = scalar_lea.vmem %s0, 3
    %s83 = smov 3
    %v84 = vld [vmem:[%s82] ss:$16 sm:%s83]
    %85 = vrot.lane.b32.xlu0 %v84, 24
    %v86 = vpop.permute.xlu0 %85
    %vm87 = vcmask 261312
    %88 = vst.msk [vmem:[#allocation0] ss:$8 sm:$0x3] %vm87, %v86
    %s89 = scalar_lea.vmem %s0, 2
    %s90 = smov 3
    %v91 = vld [vmem:[%s89] ss:$16 sm:%s90]
    %92 = vrot.lane.b32.xlu0 %v91, 16
    %v93 = vpop.permute.xlu0 %92
    %vm94 = vcmask 195712
    %95 = vst.msk [vmem:[#allocation0] ss:$8 sm:$0x3] %vm94, %v93
    %s96 = scalar_lea.vmem %s0, 1
    %s97 = smov 3
    %v98 = vld [vmem:[%s96] ss:$16 sm:%s97]
    %99 = vrot.lane.b32.xlu0 %v98, 8
    %v100 = vpop.permute.xlu0 %99
    %vm101 = vcmask 130112
    %102 = vst.msk [vmem:[#allocation0] ss:$8 sm:$0x3] %vm101, %v100
    %s104 = sshll.u32 1, 1
    %s105 = ssub.s32 %s104, 1
    %v107 = vld [vmem:[#allocation0] sm:%s105]
    %s108 = sshll.u32 1, 1
    %s109 = ssub.s32 %s108, 1
    %110 = vst [vmem:[%s1] sm:%s109] %v107
    %s111 = scalar_lea.vmem [#allocation0], 8
    %v112 = vld [vmem:[%s111] sm:%s105]
    %s113 = sshll.u32 1, 1
    %s114 = ssub.s32 %s113, 1
    %s115 = scalar_lea.vmem %s1, 1
    %116 = vst [vmem:[%s115] sm:%s114] %v112

// kernel: tile.18
$region0: #{tile.18}
  #allocation0 [shape = 's32[1]{0}', space=sflag, size = 0x4, scoped, tag = 'scoped memory for tile.18']
  %s0 = inlined_call_operand.vmem [shape: f32[8], index: 0, kind: input, shape index: {}]
  %s1 = inlined_call_operand.vmem [shape: f32[8,8], index: 1, kind: output, shape index: {}]
  // Predicated region
  $region2: #{tile.18} parent=0 // pred_check
    _
  $region3: #{tile.18} parent=0 // pred_check_branch
    %3 = sbr.rel (0) target = $region5
  $region4: #{tile.18} parent=0 // pred_region
    _
  $region5: #{tile.18} parent=0 // pred_fallthru
    _
  %v4 = vld [vmem:[%s0] ss:$0 sm:$0xff]
  %5 = vst [vmem:[%s1] sm:$0xff] %v4

// kernel: tile.19
$region0: #{tile.19}
  %s0 = inlined_call_operand.vmem [shape: f32[8,8], index: 0, kind: input, shape index: {}]
  %s1 = inlined_call_operand.vmem [shape: f32[1,64], index: 1, kind: output, shape index: {}]
  $region1: #{tile.19} parent=0
    #allocation0 [shape = 'u8[4096]{0}', space=vmem, size = 0x1000, scoped, tag = 'scoped mem for output reshape']
    %v2 = vld [vmem:[%s0] sm:$0x1]
    %vm3 = vcmask 64512
    %4 = vst.msk [vmem:[#allocation0] sm:$0x1] %vm3, %v2
    %s5 = scalar_lea.vmem %s0, 7
    %v6 = vld [vmem:[%s5] sm:$0x1]
    %7 = vrot.lane.b32.xlu0 %v6, 56
    %v8 = vpop.permute.xlu0 %7
    %vm9 = vcmask 523712
    %10 = vst.msk [vmem:[#allocation0] sm:$0x1] %vm9, %v8
    %s11 = scalar_lea.vmem %s0, 6
    %v12 = vld [vmem:[%s11] sm:$0x1]
    %13 = vrot.lane.b32.xlu0 %v12, 48
    %v14 = vpop.permute.xlu0 %13
    %vm15 = vcmask 458112
    %16 = vst.msk [vmem:[#allocation0] sm:$0x1] %vm15, %v14
    %s17 = scalar_lea.vmem %s0, 5
    %v18 = vld [vmem:[%s17] sm:$0x1]
    %19 = vrot.lane.b32.xlu0 %v18, 40
    %v20 = vpop.permute.xlu0 %19
    %vm21 = vcmask 392512
    %22 = vst.msk [vmem:[#allocation0] sm:$0x1] %vm21, %v20
    %s23 = scalar_lea.vmem %s0, 4
    %v24 = vld [vmem:[%s23] sm:$0x1]
    %25 = vrot.lane.b32.xlu0 %v24, 32
    %v26 = vpop.permute.xlu0 %25
    %vm27 = vcmask 326912
    %28 = vst.msk [vmem:[#allocation0] sm:$0x1] %vm27, %v26
    %s29 = scalar_lea.vmem %s0, 3
    %v30 = vld [vmem:[%s29] sm:$0x1]
    %31 = vrot.lane.b32.xlu0 %v30, 24
    %v32 = vpop.permute.xlu0 %31
    %vm33 = vcmask 261312
    %34 = vst.msk [vmem:[#allocation0] sm:$0x1] %vm33, %v32
    %s35 = scalar_lea.vmem %s0, 2
    %v36 = vld [vmem:[%s35] sm:$0x1]
    %37 = vrot.lane.b32.xlu0 %v36, 16
    %v38 = vpop.permute.xlu0 %37
    %vm39 = vcmask 195712
    %40 = vst.msk [vmem:[#allocation0] sm:$0x1] %vm39, %v38
    %s41 = scalar_lea.vmem %s0, 1
    %v42 = vld [vmem:[%s41] sm:$0x1]
    %43 = vrot.lane.b32.xlu0 %v42, 8
    %v44 = vpop.permute.xlu0 %43
    %vm45 = vcmask 130112
    %46 = vst.msk [vmem:[#allocation0] sm:$0x1] %vm45, %v44
    %s48 = sshll.u32 1, 1
    %s49 = ssub.s32 %s48, 1
    %v51 = vld [vmem:[#allocation0] sm:%s49]
    %s52 = sshll.u32 1, 1
    %s53 = ssub.s32 %s52, 1
    %54 = vst [vmem:[%s1] sm:%s53] %v51

// kernel: my_model_forward.1
$region0: #{my_model_forward.1}
  #allocation0 [shape = 'u32[]', space=smem, size = 0x4, offset = 0x4, fixed_abs, tag = 'smem constant byte address 0x4 - core index']
  #allocation1 [shape = 'u32[144,128]{1,0:T(1,128)}', space=vmem, size = 0x12000, scoped, tag = 'internal scratch']
  %s0 = inlined_call_operand.vmem [shape: f32[2,28,28], index: 0, kind: input, shape index: {}]
  %s1 = inlined_call_operand.vmem [shape: bf16[5,28,192], index: 1, kind: input, shape index: {}]
  %s2 = inlined_call_operand.vmem [shape: f32[1,192], index: 2, kind: input, shape index: {}]
  %s3 = inlined_call_operand.vmem [shape: f32[2,12,24], index: 3, kind: input, shape index: {}]
  %s4 = inlined_call_operand.vmem [shape: f32[2,192,96], index: 4, kind: input, shape index: {}]
  %s5 = inlined_call_operand.vmem [shape: bf16[5,96,64], index: 5, kind: input, shape index: {}]
  %s6 = inlined_call_operand.vmem [shape: f32[1,64], index: 6, kind: input, shape index: {}]
  %s7 = inlined_call_operand.vmem [shape: f32[2,4,8], index: 7, kind: input, shape index: {}]
  %s8 = inlined_call_operand.vmem [shape: f32[2,64,32], index: 8, kind: input, shape index: {}]
  %s9 = inlined_call_operand.vmem [shape: bf16[4,32,64], index: 9, kind: input, shape index: {}]
  %s10 = inlined_call_operand.vmem [shape: f32[1,64], index: 10, kind: input, shape index: {}]
  %s11 = inlined_call_operand.vmem [shape: bf16[64,26], index: 11, kind: input, shape index: {}]
  %s12 = inlined_call_operand.vmem [shape: f32[1,26], index: 12, kind: input, shape index: {}]
  %s13 = inlined_call_operand.hbm [shape: f32[2,1,26], index: 13, kind: output, shape index: {}]
  %s14 = sld [smem:[#allocation0]]
  $region85: #{my_model_forward.1} parent=0
    _
  %s16 = ssub.s32 1, %s14
  %s17 = scalar_select 0, %s16, %s14
  $region1: #{my_model_forward.1} parent=0
    #allocation2 [shape = 'u8[1024]{0}', space=vmem, size = 0x400, scoped, tag = 'output window, operand 0']
    #allocation3 [shape = 's32[2]{0}', space=sflag, size = 0x8, scoped, tag = 'scoped memory for my_model_forward.1']
    %18 = vsyncpa [#allocation3], 0
    %s19 = scalar_lea.sflag [#allocation3], 1
    %20 = vsyncpa %s19, 0
    loop: start=0, step=1, limit=4
    $region2: #{my_model_forward.1} parent=1 // loop_pre_header
      _
    $region3: #{my_model_forward.1} parent=1 // loop_header
      %s22 = sphi 0, %s26
      %p23 = scmp.ge.s32.totalorder %s22, 4
      %s32 = sphi 0, %s34
      %s35 = sphi 0, %s32
      %s36 = sphi 0, %s35
      %s52 = sphi 0, %s36
      %s56 = sphi 0, %s56
      %s58 = sphi 0, %s56
      %s59 = sphi 0, %s58
      %s73 = sphi 0, %s59
      %s77 = sphi 0, %s77
      %s79 = sphi 0, %s77
      %s80 = sphi 0, %s79
      %s94 = sphi 0, %s80
      %s98 = sphi 0, %s98
      %s100 = sphi 0, %s98
      %s101 = sphi 0, %s100
      %s115 = sphi 0, %s101
      %s119 = sphi 0, %s119
      %s121 = sphi 0, %s119
      %s122 = sphi 0, %s121
      %s136 = sphi 0, %s122
      %s140 = sphi 0, %s140
      %s142 = sphi 0, %s140
      %s143 = sphi 0, %s142
      %s157 = sphi 0, %s143
      %s161 = sphi 0, %s161
      %s163 = sphi 0, %s161
      %s164 = sphi 0, %s163
      %s178 = sphi 0, %s164
      %s182 = sphi 0, %s182
      %s184 = sphi 0, %s182
      %s185 = sphi 0, %s184
      %s199 = sphi 0, %s185
      %s203 = sphi 0, %s203
      %s205 = sphi 0, %s203
      %s206 = sphi 0, %s205
      %s220 = sphi 0, %s206
      %s224 = sphi 0, %s224
      %s226 = sphi 0, %s224
      %s227 = sphi 0, %s226
      %s241 = sphi 0, %s227
      %s245 = sphi 0, %s245
      %s247 = sphi 0, %s245
      %s248 = sphi 0, %s247
      %s262 = sphi 0, %s248
      %s266 = sphi 0, %s266
      %s268 = sphi 0, %s266
      %s269 = sphi 0, %s268
      %s283 = sphi 0, %s269
      %s287 = sphi 0, %s287
      %s289 = sphi 0, %s287
      %s290 = sphi 0, %s289
      %s304 = sphi 0, %s290
      %s310 = sphi 0, %s312
      %s313 = sphi 0, %s310
      %s314 = sphi 0, %s313
      %s330 = sphi 0, %s314
    $region4: #{my_model_forward.1} parent=1 // loop_header_branch
      %25 = sbr.rel (%p23) target = $region8
    $region5: #{my_model_forward.1} parent=1 // loop_body
      %s27 = ssub.s32 %s22, 1
      %s28 = ssub.s32 %s22, 2
      %s29 = sadd.s32 %s22, 1
      %s30 = ssub.s32 %s22, %s29
      %p31 = scmp.eq.s32.totalorder %s30, 0
      %s33 = sadd.s32 %s32, 1
      %s34 = scalar_select %p31, %s32, %s33
      %p37 = pneg %p31
      %p38 = scmp.eq.s32.totalorder %s22, 1
      %p39 = por %p37, %p38
      %p40 = scmp.ne.s32.totalorder %s32, %s35
      %p41 = scmp.eq.s32.totalorder %s22, 0
      %p42 = por %p40, %p41
      %p43 = scmp.ne.s32.totalorder %s32, %s35
      %p44 = scmp.eq.s32.totalorder %s27, 1
      %p45 = por %p43, %p44
      %p46 = scmp.ne.s32.totalorder %s35, %s36
      %p47 = scmp.eq.s32.totalorder %s27, 0
      %p48 = por %p46, %p47
      %p49 = scmp.ne.s32.totalorder %s35, %s36
      %p50 = scmp.eq.s32.totalorder %s28, 1
      %p51 = por %p49, %p50
      %p53 = scmp.ne.s32.totalorder %s36, %s52
      %p54 = scmp.eq.s32.totalorder %s28, 0
      %p55 = por %p53, %p54
      %s57 = sadd.s32 %s56, 1
      %p60 = scmp.eq.s32.totalorder %s22, 1
      %p61 = scmp.ne.s32.totalorder %s56, %s58
      %p62 = scmp.eq.s32.totalorder %s22, 0
      %p63 = por %p61, %p62
      %p64 = scmp.ne.s32.totalorder %s56, %s58
      %p65 = scmp.eq.s32.totalorder %s27, 1
      %p66 = por %p64, %p65
      %p67 = scmp.ne.s32.totalorder %s58, %s59
      %p68 = scmp.eq.s32.totalorder %s27, 0
      %p69 = por %p67, %p68
      %p70 = scmp.ne.s32.totalorder %s58, %s59
      %p71 = scmp.eq.s32.totalorder %s28, 1
      %p72 = por %p70, %p71
      %p74 = scmp.ne.s32.totalorder %s59, %s73
      %p75 = scmp.eq.s32.totalorder %s28, 0
      %p76 = por %p74, %p75
      %s78 = sadd.s32 %s77, 1
      %p81 = scmp.eq.s32.totalorder %s22, 1
      %p82 = scmp.ne.s32.totalorder %s77, %s79
      %p83 = scmp.eq.s32.totalorder %s22, 0
      %p84 = por %p82, %p83
      %p85 = scmp.ne.s32.totalorder %s77, %s79
      %p86 = scmp.eq.s32.totalorder %s27, 1
      %p87 = por %p85, %p86
      %p88 = scmp.ne.s32.totalorder %s79, %s80
      %p89 = scmp.eq.s32.totalorder %s27, 0
      %p90 = por %p88, %p89
      %p91 = scmp.ne.s32.totalorder %s79, %s80
      %p92 = scmp.eq.s32.totalorder %s28, 1
      %p93 = por %p91, %p92
      %p95 = scmp.ne.s32.totalorder %s80, %s94
      %p96 = scmp.eq.s32.totalorder %s28, 0
      %p97 = por %p95, %p96
      %s99 = sadd.s32 %s98, 1
      %p102 = scmp.eq.s32.totalorder %s22, 1
      %p103 = scmp.ne.s32.totalorder %s98, %s100
      %p104 = scmp.eq.s32.totalorder %s22, 0
      %p105 = por %p103, %p104
      %p106 = scmp.ne.s32.totalorder %s98, %s100
      %p107 = scmp.eq.s32.totalorder %s27, 1
      %p108 = por %p106, %p107
      %p109 = scmp.ne.s32.totalorder %s100, %s101
      %p110 = scmp.eq.s32.totalorder %s27, 0
      %p111 = por %p109, %p110
      %p112 = scmp.ne.s32.totalorder %s100, %s101
      %p113 = scmp.eq.s32.totalorder %s28, 1
      %p114 = por %p112, %p113
      %p116 = scmp.ne.s32.totalorder %s101, %s115
      %p117 = scmp.eq.s32.totalorder %s28, 0
      %p118 = por %p116, %p117
      %s120 = sadd.s32 %s119, 1
      %p123 = scmp.eq.s32.totalorder %s22, 1
      %p124 = scmp.ne.s32.totalorder %s119, %s121
      %p125 = scmp.eq.s32.totalorder %s22, 0
      %p126 = por %p124, %p125
      %p127 = scmp.ne.s32.totalorder %s119, %s121
      %p128 = scmp.eq.s32.totalorder %s27, 1
      %p129 = por %p127, %p128
      %p130 = scmp.ne.s32.totalorder %s121, %s122
      %p131 = scmp.eq.s32.totalorder %s27, 0
      %p132 = por %p130, %p131
      %p133 = scmp.ne.s32.totalorder %s121, %s122
      %p134 = scmp.eq.s32.totalorder %s28, 1
      %p135 = por %p133, %p134
      %p137 = scmp.ne.s32.totalorder %s122, %s136
      %p138 = scmp.eq.s32.totalorder %s28, 0
      %p139 = por %p137, %p138
      %s141 = sadd.s32 %s140, 1
      %p144 = scmp.eq.s32.totalorder %s22, 1
      %p145 = scmp.ne.s32.totalorder %s140, %s142
      %p146 = scmp.eq.s32.totalorder %s22, 0
      %p147 = por %p145, %p146
      %p148 = scmp.ne.s32.totalorder %s140, %s142
      %p149 = scmp.eq.s32.totalorder %s27, 1
      %p150 = por %p148, %p149
      %p151 = scmp.ne.s32.totalorder %s142, %s143
      %p152 = scmp.eq.s32.totalorder %s27, 0
      %p153 = por %p151, %p152
      %p154 = scmp.ne.s32.totalorder %s142, %s143
      %p155 = scmp.eq.s32.totalorder %s28, 1
      %p156 = por %p154, %p155
      %p158 = scmp.ne.s32.totalorder %s143, %s157
      %p159 = scmp.eq.s32.totalorder %s28, 0
      %p160 = por %p158, %p159
      %s162 = sadd.s32 %s161, 1
      %p165 = scmp.eq.s32.totalorder %s22, 1
      %p166 = scmp.ne.s32.totalorder %s161, %s163
      %p167 = scmp.eq.s32.totalorder %s22, 0
      %p168 = por %p166, %p167
      %p169 = scmp.ne.s32.totalorder %s161, %s163
      %p170 = scmp.eq.s32.totalorder %s27, 1
      %p171 = por %p169, %p170
      %p172 = scmp.ne.s32.totalorder %s163, %s164
      %p173 = scmp.eq.s32.totalorder %s27, 0
      %p174 = por %p172, %p173
      %p175 = scmp.ne.s32.totalorder %s163, %s164
      %p176 = scmp.eq.s32.totalorder %s28, 1
      %p177 = por %p175, %p176
      %p179 = scmp.ne.s32.totalorder %s164, %s178
      %p180 = scmp.eq.s32.totalorder %s28, 0
      %p181 = por %p179, %p180
      %s183 = sadd.s32 %s182, 1
      %p186 = scmp.eq.s32.totalorder %s22, 1
      %p187 = scmp.ne.s32.totalorder %s182, %s184
      %p188 = scmp.eq.s32.totalorder %s22, 0
      %p189 = por %p187, %p188
      %p190 = scmp.ne.s32.totalorder %s182, %s184
      %p191 = scmp.eq.s32.totalorder %s27, 1
      %p192 = por %p190, %p191
      %p193 = scmp.ne.s32.totalorder %s184, %s185
      %p194 = scmp.eq.s32.totalorder %s27, 0
      %p195 = por %p193, %p194
      %p196 = scmp.ne.s32.totalorder %s184, %s185
      %p197 = scmp.eq.s32.totalorder %s28, 1
      %p198 = por %p196, %p197
      %p200 = scmp.ne.s32.totalorder %s185, %s199
      %p201 = scmp.eq.s32.totalorder %s28, 0
      %p202 = por %p200, %p201
      %s204 = sadd.s32 %s203, 1
      %p207 = scmp.eq.s32.totalorder %s22, 1
      %p208 = scmp.ne.s32.totalorder %s203, %s205
      %p209 = scmp.eq.s32.totalorder %s22, 0
      %p210 = por %p208, %p209
      %p211 = scmp.ne.s32.totalorder %s203, %s205
      %p212 = scmp.eq.s32.totalorder %s27, 1
      %p213 = por %p211, %p212
      %p214 = scmp.ne.s32.totalorder %s205, %s206
      %p215 = scmp.eq.s32.totalorder %s27, 0
      %p216 = por %p214, %p215
      %p217 = scmp.ne.s32.totalorder %s205, %s206
      %p218 = scmp.eq.s32.totalorder %s28, 1
      %p219 = por %p217, %p218
      %p221 = scmp.ne.s32.totalorder %s206, %s220
      %p222 = scmp.eq.s32.totalorder %s28, 0
      %p223 = por %p221, %p222
      %s225 = sadd.s32 %s224, 1
      %p228 = scmp.eq.s32.totalorder %s22, 1
      %p229 = scmp.ne.s32.totalorder %s224, %s226
      %p230 = scmp.eq.s32.totalorder %s22, 0
      %p231 = por %p229, %p230
      %p232 = scmp.ne.s32.totalorder %s224, %s226
      %p233 = scmp.eq.s32.totalorder %s27, 1
      %p234 = por %p232, %p233
      %p235 = scmp.ne.s32.totalorder %s226, %s227
      %p236 = scmp.eq.s32.totalorder %s27, 0
      %p237 = por %p235, %p236
      %p238 = scmp.ne.s32.totalorder %s226, %s227
      %p239 = scmp.eq.s32.totalorder %s28, 1
      %p240 = por %p238, %p239
      %p242 = scmp.ne.s32.totalorder %s227, %s241
      %p243 = scmp.eq.s32.totalorder %s28, 0
      %p244 = por %p242, %p243
      %s246 = sadd.s32 %s245, 1
      %p249 = scmp.eq.s32.totalorder %s22, 1
      %p250 = scmp.ne.s32.totalorder %s245, %s247
      %p251 = scmp.eq.s32.totalorder %s22, 0
      %p252 = por %p250, %p251
      %p253 = scmp.ne.s32.totalorder %s245, %s247
      %p254 = scmp.eq.s32.totalorder %s27, 1
      %p255 = por %p253, %p254
      %p256 = scmp.ne.s32.totalorder %s247, %s248
      %p257 = scmp.eq.s32.totalorder %s27, 0
      %p258 = por %p256, %p257
      %p259 = scmp.ne.s32.totalorder %s247, %s248
      %p260 = scmp.eq.s32.totalorder %s28, 1
      %p261 = por %p259, %p260
      %p263 = scmp.ne.s32.totalorder %s248, %s262
      %p264 = scmp.eq.s32.totalorder %s28, 0
      %p265 = por %p263, %p264
      %s267 = sadd.s32 %s266, 1
      %p270 = scmp.eq.s32.totalorder %s22, 1
      %p271 = scmp.ne.s32.totalorder %s266, %s268
      %p272 = scmp.eq.s32.totalorder %s22, 0
      %p273 = por %p271, %p272
      %p274 = scmp.ne.s32.totalorder %s266, %s268
      %p275 = scmp.eq.s32.totalorder %s27, 1
      %p276 = por %p274, %p275
      %p277 = scmp.ne.s32.totalorder %s268, %s269
      %p278 = scmp.eq.s32.totalorder %s27, 0
      %p279 = por %p277, %p278
      %p280 = scmp.ne.s32.totalorder %s268, %s269
      %p281 = scmp.eq.s32.totalorder %s28, 1
      %p282 = por %p280, %p281
      %p284 = scmp.ne.s32.totalorder %s269, %s283
      %p285 = scmp.eq.s32.totalorder %s28, 0
      %p286 = por %p284, %p285
      %s288 = sadd.s32 %s287, 1
      %p291 = scmp.eq.s32.totalorder %s22, 1
      %p292 = scmp.ne.s32.totalorder %s287, %s289
      %p293 = scmp.eq.s32.totalorder %s22, 0
      %p294 = por %p292, %p293
      %p295 = scmp.ne.s32.totalorder %s287, %s289
      %p296 = scmp.eq.s32.totalorder %s27, 1
      %p297 = por %p295, %p296
      %p298 = scmp.ne.s32.totalorder %s289, %s290
      %p299 = scmp.eq.s32.totalorder %s27, 0
      %p300 = por %p298, %p299
      %p301 = scmp.ne.s32.totalorder %s289, %s290
      %p302 = scmp.eq.s32.totalorder %s28, 1
      %p303 = por %p301, %p302
      %p305 = scmp.ne.s32.totalorder %s290, %s304
      %p306 = scmp.eq.s32.totalorder %s28, 0
      %p307 = por %p305, %p306
      %s308 = ssub.s32 %s22, %s29
      %p309 = scmp.eq.s32.totalorder %s308, 0
      %s311 = sadd.s32 %s310, 1
      %s312 = scalar_select %p309, %s310, %s311
      %p315 = pneg %p309
      %p316 = scmp.eq.s32.totalorder %s22, 1
      %p317 = por %p315, %p316
      %p318 = scmp.ne.s32.totalorder %s310, %s313
      %p319 = scmp.eq.s32.totalorder %s22, 0
      %p320 = por %p318, %p319
      %p321 = scmp.ne.s32.totalorder %s310, %s313
      %p322 = scmp.eq.s32.totalorder %s27, 1
      %p323 = por %p321, %p322
      %p324 = scmp.ne.s32.totalorder %s313, %s314
      %p325 = scmp.eq.s32.totalorder %s27, 0
      %p326 = por %p324, %p325
      %p327 = scmp.ne.s32.totalorder %s313, %s314
      %p328 = scmp.eq.s32.totalorder %s28, 1
      %p329 = por %p327, %p328
      %p331 = scmp.ne.s32.totalorder %s314, %s330
      %p332 = scmp.eq.s32.totalorder %s28, 0
      %p333 = por %p331, %p332
      %p334 = scmp.le.s32.totalorder 1, %s22
      %p335 = scmp.lt.s32.totalorder %s22, 3
      %p336 = pnand %p334, %p335
      %p337 = pneg %p336
      // Predicated region
      $region9: #{my_model_forward.1} parent=5 // pred_check
        _
      $region10: #{my_model_forward.1} parent=5 // pred_check_branch
        %339 = sbr.rel (%p336) target = $region12
      $region11: #{my_model_forward.1} parent=5 // pred_region
        %s340 = ssub.s32 %s22, 1
        // Predicated region
        $region13: #{my_model_forward.1} parent=11 // pred_check
          %p341 = pneg %p69
        $region14: #{my_model_forward.1} parent=11 // pred_check_branch
          %343 = sbr.rel (%p341) target = $region16
        $region15: #{my_model_forward.1} parent=11 // pred_region
          _
        $region16: #{my_model_forward.1} parent=11 // pred_fallthru
          _
        // Predicated region
        $region17: #{my_model_forward.1} parent=11 // pred_check
          %p344 = pneg %p90
        $region18: #{my_model_forward.1} parent=11 // pred_check_branch
          %346 = sbr.rel (%p344) target = $region20
        $region19: #{my_model_forward.1} parent=11 // pred_region
          _
        $region20: #{my_model_forward.1} parent=11 // pred_fallthru
          _
        // Predicated region
        $region21: #{my_model_forward.1} parent=11 // pred_check
          %p347 = pneg %p111
        $region22: #{my_model_forward.1} parent=11 // pred_check_branch
          %349 = sbr.rel (%p347) target = $region24
        $region23: #{my_model_forward.1} parent=11 // pred_region
          _
        $region24: #{my_model_forward.1} parent=11 // pred_fallthru
          _
        // Predicated region
        $region25: #{my_model_forward.1} parent=11 // pred_check
          %p350 = pneg %p132
        $region26: #{my_model_forward.1} parent=11 // pred_check_branch
          %352 = sbr.rel (%p350) target = $region28
        $region27: #{my_model_forward.1} parent=11 // pred_region
          _
        $region28: #{my_model_forward.1} parent=11 // pred_fallthru
          _
        // Predicated region
        $region29: #{my_model_forward.1} parent=11 // pred_check
          %p353 = pneg %p153
        $region30: #{my_model_forward.1} parent=11 // pred_check_branch
          %355 = sbr.rel (%p353) target = $region32
        $region31: #{my_model_forward.1} parent=11 // pred_region
          _
        $region32: #{my_model_forward.1} parent=11 // pred_fallthru
          _
        // Predicated region
        $region33: #{my_model_forward.1} parent=11 // pred_check
          %p356 = pneg %p174
        $region34: #{my_model_forward.1} parent=11 // pred_check_branch
          %358 = sbr.rel (%p356) target = $region36
        $region35: #{my_model_forward.1} parent=11 // pred_region
          _
        $region36: #{my_model_forward.1} parent=11 // pred_fallthru
          _
        // Predicated region
        $region37: #{my_model_forward.1} parent=11 // pred_check
          %p359 = pneg %p195
        $region38: #{my_model_forward.1} parent=11 // pred_check_branch
          %361 = sbr.rel (%p359) target = $region40
        $region39: #{my_model_forward.1} parent=11 // pred_region
          _
        $region40: #{my_model_forward.1} parent=11 // pred_fallthru
          _
        // Predicated region
        $region41: #{my_model_forward.1} parent=11 // pred_check
          %p362 = pneg %p216
        $region42: #{my_model_forward.1} parent=11 // pred_check_branch
          %364 = sbr.rel (%p362) target = $region44
        $region43: #{my_model_forward.1} parent=11 // pred_region
          _
        $region44: #{my_model_forward.1} parent=11 // pred_fallthru
          _
        // Predicated region
        $region45: #{my_model_forward.1} parent=11 // pred_check
          %p365 = pneg %p237
        $region46: #{my_model_forward.1} parent=11 // pred_check_branch
          %367 = sbr.rel (%p365) target = $region48
        $region47: #{my_model_forward.1} parent=11 // pred_region
          _
        $region48: #{my_model_forward.1} parent=11 // pred_fallthru
          _
        // Predicated region
        $region49: #{my_model_forward.1} parent=11 // pred_check
          %p368 = pneg %p258
        $region50: #{my_model_forward.1} parent=11 // pred_check_branch
          %370 = sbr.rel (%p368) target = $region52
        $region51: #{my_model_forward.1} parent=11 // pred_region
          _
        $region52: #{my_model_forward.1} parent=11 // pred_fallthru
          _
        // Predicated region
        $region53: #{my_model_forward.1} parent=11 // pred_check
          %p371 = pneg %p279
        $region54: #{my_model_forward.1} parent=11 // pred_check_branch
          %373 = sbr.rel (%p371) target = $region56
        $region55: #{my_model_forward.1} parent=11 // pred_region
          _
        $region56: #{my_model_forward.1} parent=11 // pred_fallthru
          _
        // Predicated region
        $region57: #{my_model_forward.1} parent=11 // pred_check
          %p374 = pneg %p300
        $region58: #{my_model_forward.1} parent=11 // pred_check_branch
          %376 = sbr.rel (%p374) target = $region60
        $region59: #{my_model_forward.1} parent=11 // pred_region
          _
        $region60: #{my_model_forward.1} parent=11 // pred_fallthru
          _
      $region12: #{my_model_forward.1} parent=5 // pred_fallthru
        _
      %p377 = scmp.lt.s32.totalorder %s22, 2
      // Predicated region
      $region61: #{my_model_forward.1} parent=5 // pred_check
        %p378 = pneg %p377
      $region62: #{my_model_forward.1} parent=5 // pred_check_branch
        %380 = sbr.rel (%p378) target = $region64
      $region63: #{my_model_forward.1} parent=5 // pred_region
        // Predicated region
        $region65: #{my_model_forward.1} parent=63 // pred_check
          %p381 = pneg %p42
        $region66: #{my_model_forward.1} parent=63 // pred_check_branch
          %383 = sbr.rel (%p381) target = $region68
        $region67: #{my_model_forward.1} parent=63 // pred_region
          %p384 = scmp.lt.s32.totalorder %s22, 1
          %s385 = scalar_select %p384, %s22, 1
          %s386 = smul.addr %s385, 4
          %s387 = smul.addr %s386, 8
          %s388 = scalar_lea.vmem %s0, %s387
        $region68: #{my_model_forward.1} parent=63 // pred_fallthru
          _
      $region64: #{my_model_forward.1} parent=5 // pred_fallthru
        _
      %p389 = scmp.le.s32.totalorder 1, %s22
      %p390 = scmp.lt.s32.totalorder %s22, 3
      %p391 = pnand %p389, %p390
      %p392 = pneg %p391
      // Predicated region
      $region69: #{my_model_forward.1} parent=5 // pred_check
        _
      $region70: #{my_model_forward.1} parent=5 // pred_check_branch
        %394 = sbr.rel (%p391) target = $region72
      $region71: #{my_model_forward.1} parent=5 // pred_region
        %s395 = ssub.s32 %s22, 1
        %p396 = scmp.lt.s32.totalorder %s27, 1
        %s397 = scalar_select %p396, %s27, 1
        %s398 = smul.addr %s397, 4
        %s399 = smul.addr %s398, 8
        %s400 = scalar_lea.vmem %s0, %s399
        %p401 = pneg %p48
        %p402 = pneg %p45
        %p403 = pneg %p69
        %p404 = pneg %p66
        %p405 = pneg %p90
        %p406 = pneg %p87
        %p407 = pneg %p111
        %p408 = pneg %p108
        %p409 = pneg %p132
        %p410 = pneg %p129
        %p411 = pneg %p153
        %p412 = pneg %p150
        %p413 = pneg %p174
        %p414 = pneg %p171
        %p415 = pneg %p195
        %p416 = pneg %p192
        %p417 = pneg %p216
        %p418 = pneg %p213
        %p419 = pneg %p237
        %p420 = pneg %p234
        %p421 = pneg %p258
        %p422 = pneg %p255
        %p423 = pneg %p279
        %p424 = pneg %p276
        %p425 = pneg %p300
        %p426 = pneg %p297
        %p427 = pneg %p326
        %p428 = pneg %p323
        %s429 = sand.u32 %s313, 1
        %s430 = scalar_lea.sflag [#allocation3], %s429
        %s431 = sand.u32 %s313, 1
        %s432 = scalar_lea.vmem [#allocation2], %s431
        %p433 = scmp.lt.s32.totalorder %s27, 1
        %s434 = scalar_select %p433, %s27, 1
        %s435 = smul.addr %s434, 4
        %s436 = smul.addr %s435, 8
        %s437 = scalar_lea.vmem %s0, %s436
        %v439 = vld [vmem:[%s437] sm:$0xff]
        %v440 = vld [vmem:[%s437 + $0x8] sm:$0xff]
        %v441 = vld [vmem:[%s437 + $0x10] sm:$0xff]
        %v442 = vld [vmem:[%s437 + $0x18] sm:$0xf]
        %v443 = vpack.c.bf16 %v440, %v439
        %v444 = vpack.c.bf16 %v442, %v441
        %v445 = vld [vmem:[%s1] sm:$0xff]
        %v446 = vld [vmem:[%s1 + $0x8] sm:$0xff]
        %v447 = vld [vmem:[%s1 + $0x10] sm:$0xff]
        %v448 = vld [vmem:[%s1 + $0x18] sm:$0x33]
        %s449 = scalar_lea.vmem %s1, 32
        %v450 = vld [vmem:[%s449] sm:$0xff]
        %v451 = vld [vmem:[%s449 + $0x8] sm:$0xff]
        %v452 = vld [vmem:[%s449 + $0x10] sm:$0xff]
        %v453 = vld [vmem:[%s449 + $0x18] sm:$0x33]
        %vm454 = vsmask.f32 7424
        %v456 = vshrl.u32 %v443, 16
        %v458 = vshll.u32 %v443, 16
        %v460 = vrot.slane %v458, 1
        %v461 = vor.u32 %v456, %v460
        %v463 = vshll.u32 %v444, 16
        %v465 = vrot.slane %v463, 1
        %v466 = vsel %vm454, %v461, %v465
        %v467 = vshrl.u32 %v444, 16
        %v469 = vor.u32 %v467, %v465
        %v474 = vunpack.c.l.b16 %v450
        %v475 = vunpack.c.h.b16 %v450
        %v476 = vunpack.c.l.b16 %v451
        %v477 = vunpack.c.h.b16 %v451
        %v478 = vunpack.c.l.b16 %v452
        %v479 = vunpack.c.h.b16 %v452
        %v480 = vunpack.c.l.b16 %v453
        %v481 = vunpack.c.h.b16 %v453
        %v482 = vpack.c.b16 %v476, %v474
        %v483 = vpack.c.b16 %v477, %v475
        %v484 = vpack.c.b16 %v480, %v478
        %v485 = vpack.c.b16 %v481, %v479
        %vm488 = vcmask 228352
        %v490 = vsel %vm488, %v466, 0
        %v493 = vsel %vm488, %v469, 0
        %vm495 = vcmask 1045504
        %v497 = vsel %vm495, %v484, 0
        %v500 = vsel %vm495, %v485, 0
        %502 = vmatprep.subr.bf16.mxu0 0
        %503 = vmatpush1.bf16.msra.mxu0 0
        %504 = vmatprep.subr.bf16.mxu0 0
        %505 = vmatpush1.bf16.msra.mxu0 0
        %506 = vmatprep.subr.bf16.mxu0 0
        %507 = vmatpush1.bf16.msra.mxu0 0
        %508 = vmatprep.subr.bf16.mxu0 0
        %509 = vmatpush1.bf16.msra.mxu0 0
        %510 = vmatprep.subr.bf16.mxu0 0
        %511 = vmatpush1.bf16.msra.mxu0 0
        %512 = vmatprep.subr.bf16.mxu0 0
        %513 = vmatpush1.bf16.msra.mxu0 0
        %514 = vmatprep.subr.bf16.mxu0 %v500
        %515 = vmatpush1.bf16.msra.mxu0 %v497
        %516 = vmatprep.subr.bf16.mxu0 %v483
        %517 = vmatpush1.bf16.msra.mxu0 %v482
        %518 = vmatprep.subr.bf16.mxu0 0
        %519 = vmatpush2.bf16.msra.mxu0 0
        %520 = vmatprep.subr.bf16.mxu0 0
        %521 = vmatpush2.bf16.msra.mxu0 0
        %522 = vmatprep.subr.bf16.mxu0 0
        %523 = vmatpush2.bf16.msra.mxu0 0
        %524 = vmatprep.subr.bf16.mxu0 0
        %525 = vmatpush2.bf16.msra.mxu0 0
        %526 = vmatprep.subr.bf16.mxu0 0
        %527 = vmatpush2.bf16.msra.mxu0 0
        %528 = vmatprep.subr.bf16.mxu0 0
        %529 = vmatpush2.bf16.msra.mxu0 0
        %530 = vmatprep.subr.bf16.mxu0 0
        %531 = vmatpush2.bf16.msra.mxu0 0
        %532 = vmatprep.subr.bf16.mxu0 0
        %533 = vmatpush2.bf16.msra.mxu0 0
        %534 = vmatprep.mubr.bf16.mxu0 0
        %535 = vmatmul.mubr.bf16.gmra.mxu0 %v490
        %v536 = vpop.f32.mrf.mxu0
        %v537 = vadd.f32 0.0, %v536
        %v538 = vpop.f32.mrf.mxu0
        %v539 = vadd.f32 0.0, %v538
        %v540 = vpop.f32.mrf.mxu0
        %v541 = vadd.f32 0.0, %v540
        %v542 = vpop.f32.mrf.mxu0
        %v543 = vadd.f32 0.0, %v542
        %544 = vmatprep.mubr.bf16.mxu0 0
        %545 = vmatmul.mubr.bf16.gmra.mxu0 %v493
        %v546 = vpop.f32.mrf.mxu0
        %v547 = vadd.f32 0.0, %v546
        %v548 = vpop.f32.mrf.mxu0
        %v549 = vadd.f32 0.0, %v548
        %v550 = vpop.f32.mrf.mxu0
        %v551 = vpop.f32.mrf.mxu0
        %552 = vdwg.mxu0
        %v557 = vunpack.c.l.b16 %v445
        %v558 = vunpack.c.h.b16 %v445
        %v559 = vunpack.c.l.b16 %v446
        %v560 = vunpack.c.h.b16 %v446
        %v561 = vunpack.c.l.b16 %v447
        %v562 = vunpack.c.h.b16 %v447
        %v563 = vunpack.c.l.b16 %v448
        %v564 = vunpack.c.h.b16 %v448
        %v565 = vpack.c.b16 %v559, %v557
        %v566 = vpack.c.b16 %v560, %v558
        %v567 = vpack.c.b16 %v563, %v561
        %v568 = vpack.c.b16 %v564, %v562
        %v571 = vsel %vm488, %v443, 0
        %v573 = vsel %vm488, %v444, 0
        %v576 = vsel %vm495, %v567, 0
        %v579 = vsel %vm495, %v568, 0
        %581 = vmatprep.subr.bf16.mxu0 0
        %582 = vmatpush1.bf16.msra.mxu0 0
        %583 = vmatprep.subr.bf16.mxu0 0
        %584 = vmatpush1.bf16.msra.mxu0 0
        %585 = vmatprep.subr.bf16.mxu0 0
        %586 = vmatpush1.bf16.msra.mxu0 0
        %587 = vmatprep.subr.bf16.mxu0 0
        %588 = vmatpush1.bf16.msra.mxu0 0
        %589 = vmatprep.subr.bf16.mxu0 0
        %590 = vmatpush1.bf16.msra.mxu0 0
        %591 = vmatprep.subr.bf16.mxu0 0
        %592 = vmatpush1.bf16.msra.mxu0 0
        %593 = vmatprep.subr.bf16.mxu0 %v579
        %594 = vmatpush1.bf16.msra.mxu0 %v576
        %595 = vmatprep.subr.bf16.mxu0 %v566
        %596 = vmatpush1.bf16.msra.mxu0 %v565
        %597 = vmatprep.subr.bf16.mxu0 0
        %598 = vmatpush2.bf16.msra.mxu0 0
        %599 = vmatprep.subr.bf16.mxu0 0
        %600 = vmatpush2.bf16.msra.mxu0 0
        %601 = vmatprep.subr.bf16.mxu0 0
        %602 = vmatpush2.bf16.msra.mxu0 0
        %603 = vmatprep.subr.bf16.mxu0 0
        %604 = vmatpush2.bf16.msra.mxu0 0
        %605 = vmatprep.subr.bf16.mxu0 0
        %606 = vmatpush2.bf16.msra.mxu0 0
        %607 = vmatprep.subr.bf16.mxu0 0
        %608 = vmatpush2.bf16.msra.mxu0 0
        %609 = vmatprep.subr.bf16.mxu0 0
        %610 = vmatpush2.bf16.msra.mxu0 0
        %611 = vmatprep.subr.bf16.mxu0 0
        %612 = vmatpush2.bf16.msra.mxu0 0
        %613 = vmatprep.mubr.bf16.mxu0 0
        %614 = vmatmul.mubr.bf16.gmra.mxu0 %v571
        %v615 = vpop.f32.mrf.mxu0
        %v616 = vadd.f32 %v537, %v615
        %v617 = vpop.f32.mrf.mxu0
        %v618 = vadd.f32 %v539, %v617
        %v619 = vpop.f32.mrf.mxu0
        %v620 = vadd.f32 %v541, %v619
        %v621 = vpop.f32.mrf.mxu0
        %v622 = vadd.f32 %v543, %v621
        %623 = vmatprep.mubr.bf16.mxu0 0
        %624 = vmatmul.mubr.bf16.gmra.mxu0 %v573
        %v625 = vpop.f32.mrf.mxu0
        %v626 = vadd.f32 %v547, %v625
        %v627 = vpop.f32.mrf.mxu0
        %v628 = vadd.f32 %v549, %v627
        %v629 = vpop.f32.mrf.mxu0
        %v630 = vpop.f32.mrf.mxu0
        %631 = vdwg.mxu0
        %s632 = scalar_lea.vmem %s1, 64
        %v633 = vld [vmem:[%s632] sm:$0xff]
        %v634 = vld [vmem:[%s632 + $0x8] sm:$0xff]
        %v635 = vld [vmem:[%s632 + $0x10] sm:$0xff]
        %v636 = vld [vmem:[%s632 + $0x18] sm:$0x33]
        %vm639 = vcmask 1046528
        %v640 = vrot.slane %v443, 1
        %v641 = vrot.slane %v444, 1
        %v642 = vsel %vm639, %v640, %v641
        %v647 = vunpack.c.l.b16 %v633
        %v648 = vunpack.c.h.b16 %v633
        %v649 = vunpack.c.l.b16 %v634
        %v650 = vunpack.c.h.b16 %v634
        %v651 = vunpack.c.l.b16 %v635
        %v652 = vunpack.c.h.b16 %v635
        %v653 = vunpack.c.l.b16 %v636
        %v654 = vunpack.c.h.b16 %v636
        %v655 = vpack.c.b16 %v649, %v647
        %v656 = vpack.c.b16 %v650, %v648
        %v657 = vpack.c.b16 %v653, %v651
        %v658 = vpack.c.b16 %v654, %v652
        %v662 = vsel %vm488, %v642, 0
        %v665 = vsel %vm488, %v641, 0
        %v668 = vsel %vm495, %v657, 0
        %v671 = vsel %vm495, %v658, 0
        %673 = vmatprep.subr.bf16.mxu0 0
        %674 = vmatpush1.bf16.msra.mxu0 0
        %675 = vmatprep.subr.bf16.mxu0 0
        %676 = vmatpush1.bf16.msra.mxu0 0
        %677 = vmatprep.subr.bf16.mxu0 0
        %678 = vmatpush1.bf16.msra.mxu0 0
        %679 = vmatprep.subr.bf16.mxu0 0
        %680 = vmatpush1.bf16.msra.mxu0 0
        %681 = vmatprep.subr.bf16.mxu0 0
        %682 = vmatpush1.bf16.msra.mxu0 0
        %683 = vmatprep.subr.bf16.mxu0 0
        %684 = vmatpush1.bf16.msra.mxu0 0
        %685 = vmatprep.subr.bf16.mxu0 %v671
        %686 = vmatpush1.bf16.msra.mxu0 %v668
        %687 = vmatprep.subr.bf16.mxu0 %v656
        %688 = vmatpush1.bf16.msra.mxu0 %v655
        %689 = vmatprep.subr.bf16.mxu0 0
        %690 = vmatpush2.bf16.msra.mxu0 0
        %691 = vmatprep.subr.bf16.mxu0 0
        %692 = vmatpush2.bf16.msra.mxu0 0
        %693 = vmatprep.subr.bf16.mxu0 0
        %694 = vmatpush2.bf16.msra.mxu0 0
        %695 = vmatprep.subr.bf16.mxu0 0
        %696 = vmatpush2.bf16.msra.mxu0 0
        %697 = vmatprep.subr.bf16.mxu0 0
        %698 = vmatpush2.bf16.msra.mxu0 0
        %699 = vmatprep.subr.bf16.mxu0 0
        %700 = vmatpush2.bf16.msra.mxu0 0
        %701 = vmatprep.subr.bf16.mxu0 0
        %702 = vmatpush2.bf16.msra.mxu0 0
        %703 = vmatprep.subr.bf16.mxu0 0
        %704 = vmatpush2.bf16.msra.mxu0 0
        %705 = vmatprep.mubr.bf16.mxu0 0
        %706 = vmatmul.mubr.bf16.gmra.mxu0 %v662
        %v707 = vpop.f32.mrf.mxu0
        %v708 = vadd.f32 0.0, %v707
        %v709 = vpop.f32.mrf.mxu0
        %v710 = vadd.f32 0.0, %v709
        %v711 = vpop.f32.mrf.mxu0
        %v712 = vadd.f32 0.0, %v711
        %v713 = vpop.f32.mrf.mxu0
        %v714 = vadd.f32 0.0, %v713
        %715 = vmatprep.mubr.bf16.mxu0 0
        %716 = vmatmul.mubr.bf16.gmra.mxu0 %v665
        %v717 = vpop.f32.mrf.mxu0
        %v718 = vadd.f32 0.0, %v717
        %v719 = vpop.f32.mrf.mxu0
        %v720 = vadd.f32 0.0, %v719
        %v721 = vpop.f32.mrf.mxu0
        %v722 = vpop.f32.mrf.mxu0
        %723 = vdwg.mxu0
        %v724 = vadd.f32 %v616, %v708
        %v725 = vadd.f32 %v618, %v710
        %v726 = vadd.f32 %v620, %v712
        %v727 = vadd.f32 %v622, %v714
        %v728 = vadd.f32 %v626, %v718
        %v729 = vadd.f32 %v628, %v720
        %s730 = scalar_lea.vmem %s1, 96
        %v731 = vld [vmem:[%s730] sm:$0xff]
        %v732 = vld [vmem:[%s730 + $0x8] sm:$0xff]
        %v733 = vld [vmem:[%s730 + $0x10] sm:$0xff]
        %v734 = vld [vmem:[%s730 + $0x18] sm:$0x33]
        %vm735 = vsmask.f32 6400
        %v736 = vrot.slane %v456, 1
        %v737 = vrot.slane %v458, 2
        %v738 = vor.u32 %v736, %v737
        %v739 = vrot.slane %v467, 1
        %v740 = vrot.slane %v463, 2
        %v741 = vor.u32 %v739, %v740
        %v742 = vsel %vm735, %v738, %v741
        %v747 = vunpack.c.l.b16 %v731
        %v748 = vunpack.c.h.b16 %v731
        %v749 = vunpack.c.l.b16 %v732
        %v750 = vunpack.c.h.b16 %v732
        %v751 = vunpack.c.l.b16 %v733
        %v752 = vunpack.c.h.b16 %v733
        %v753 = vunpack.c.l.b16 %v734
        %v754 = vunpack.c.h.b16 %v734
        %v755 = vpack.c.b16 %v749, %v747
        %v756 = vpack.c.b16 %v750, %v748
        %v757 = vpack.c.b16 %v753, %v751
        %v758 = vpack.c.b16 %v754, %v752
        %v762 = vsel %vm488, %v742, 0
        %v765 = vsel %vm488, %v741, 0
        %v768 = vsel %vm495, %v757, 0
        %v771 = vsel %vm495, %v758, 0
        %773 = vmatprep.subr.bf16.mxu0 0
        %774 = vmatpush1.bf16.msra.mxu0 0
        %775 = vmatprep.subr.bf16.mxu0 0
        %776 = vmatpush1.bf16.msra.mxu0 0
        %777 = vmatprep.subr.bf16.mxu0 0
        %778 = vmatpush1.bf16.msra.mxu0 0
        %779 = vmatprep.subr.bf16.mxu0 0
        %780 = vmatpush1.bf16.msra.mxu0 0
        %781 = vmatprep.subr.bf16.mxu0 0
        %782 = vmatpush1.bf16.msra.mxu0 0
        %783 = vmatprep.subr.bf16.mxu0 0
        %784 = vmatpush1.bf16.msra.mxu0 0
        %785 = vmatprep.subr.bf16.mxu0 %v771
        %786 = vmatpush1.bf16.msra.mxu0 %v768
        %787 = vmatprep.subr.bf16.mxu0 %v756
        %788 = vmatpush1.bf16.msra.mxu0 %v755
        %789 = vmatprep.subr.bf16.mxu0 0
        %790 = vmatpush2.bf16.msra.mxu0 0
        %791 = vmatprep.subr.bf16.mxu0 0
        %792 = vmatpush2.bf16.msra.mxu0 0
        %793 = vmatprep.subr.bf16.mxu0 0
        %794 = vmatpush2.bf16.msra.mxu0 0
        %795 = vmatprep.subr.bf16.mxu0 0
        %796 = vmatpush2.bf16.msra.mxu0 0
        %797 = vmatprep.subr.bf16.mxu0 0
        %798 = vmatpush2.bf16.msra.mxu0 0
        %799 = vmatprep.subr.bf16.mxu0 0
        %800 = vmatpush2.bf16.msra.mxu0 0
        %801 = vmatprep.subr.bf16.mxu0 0
        %802 = vmatpush2.bf16.msra.mxu0 0
        %803 = vmatprep.subr.bf16.mxu0 0
        %804 = vmatpush2.bf16.msra.mxu0 0
        %805 = vmatprep.mubr.bf16.mxu0 0
        %806 = vmatmul.mubr.bf16.gmra.mxu0 %v762
        %v807 = vpop.f32.mrf.mxu0
        %v808 = vadd.f32 0.0, %v807
        %v809 = vpop.f32.mrf.mxu0
        %v810 = vadd.f32 0.0, %v809
        %v811 = vpop.f32.mrf.mxu0
        %v812 = vadd.f32 0.0, %v811
        %v813 = vpop.f32.mrf.mxu0
        %v814 = vadd.f32 0.0, %v813
        %815 = vmatprep.mubr.bf16.mxu0 0
        %816 = vmatmul.mubr.bf16.gmra.mxu0 %v765
        %v817 = vpop.f32.mrf.mxu0
        %v818 = vadd.f32 0.0, %v817
        %v819 = vpop.f32.mrf.mxu0
        %v820 = vadd.f32 0.0, %v819
        %v821 = vpop.f32.mrf.mxu0
        %v822 = vpop.f32.mrf.mxu0
        %823 = vdwg.mxu0
        %v824 = vadd.f32 %v724, %v808
        %v825 = vadd.f32 %v725, %v810
        %v826 = vadd.f32 %v726, %v812
        %v827 = vadd.f32 %v727, %v814
        %v828 = vadd.f32 %v728, %v818
        %v829 = vadd.f32 %v729, %v820
        %s830 = scalar_lea.vmem %s1, 128
        %v831 = vld [vmem:[%s830] sm:$0xff]
        %v832 = vld [vmem:[%s830 + $0x8] sm:$0xff]
        %v833 = vld [vmem:[%s830 + $0x10] sm:$0xff]
        %v834 = vld [vmem:[%s830 + $0x18] sm:$0x33]
        %vm835 = vcmask 1045504
        %v836 = vrot.slane %v443, 2
        %v837 = vrot.slane %v444, 2
        %v838 = vsel %vm835, %v836, %v837
        %v843 = vunpack.c.l.b16 %v831
        %v844 = vunpack.c.h.b16 %v831
        %v845 = vunpack.c.l.b16 %v832
        %v846 = vunpack.c.h.b16 %v832
        %v847 = vunpack.c.l.b16 %v833
        %v848 = vunpack.c.h.b16 %v833
        %v849 = vunpack.c.l.b16 %v834
        %v850 = vunpack.c.h.b16 %v834
        %v851 = vpack.c.b16 %v845, %v843
        %v852 = vpack.c.b16 %v846, %v844
        %v853 = vpack.c.b16 %v849, %v847
        %v854 = vpack.c.b16 %v850, %v848
        %v858 = vsel %vm488, %v838, 0
        %v861 = vsel %vm488, %v837, 0
        %v864 = vsel %vm495, %v853, 0
        %v867 = vsel %vm495, %v854, 0
        %869 = vmatprep.subr.bf16.mxu0 0
        %870 = vmatpush1.bf16.msra.mxu0 0
        %871 = vmatprep.subr.bf16.mxu0 0
        %872 = vmatpush1.bf16.msra.mxu0 0
        %873 = vmatprep.subr.bf16.mxu0 0
        %874 = vmatpush1.bf16.msra.mxu0 0
        %875 = vmatprep.subr.bf16.mxu0 0
        %876 = vmatpush1.bf16.msra.mxu0 0
        %877 = vmatprep.subr.bf16.mxu0 0
        %878 = vmatpush1.bf16.msra.mxu0 0
        %879 = vmatprep.subr.bf16.mxu0 0
        %880 = vmatpush1.bf16.msra.mxu0 0
        %881 = vmatprep.subr.bf16.mxu0 %v867
        %882 = vmatpush1.bf16.msra.mxu0 %v864
        %883 = vmatprep.subr.bf16.mxu0 %v852
        %884 = vmatpush1.bf16.msra.mxu0 %v851
        %885 = vmatprep.subr.bf16.mxu0 0
        %886 = vmatpush2.bf16.msra.mxu0 0
        %887 = vmatprep.subr.bf16.mxu0 0
        %888 = vmatpush2.bf16.msra.mxu0 0
        %889 = vmatprep.subr.bf16.mxu0 0
        %890 = vmatpush2.bf16.msra.mxu0 0
        %891 = vmatprep.subr.bf16.mxu0 0
        %892 = vmatpush2.bf16.msra.mxu0 0
        %893 = vmatprep.subr.bf16.mxu0 0
        %894 = vmatpush2.bf16.msra.mxu0 0
        %895 = vmatprep.subr.bf16.mxu0 0
        %896 = vmatpush2.bf16.msra.mxu0 0
        %897 = vmatprep.subr.bf16.mxu0 0
        %898 = vmatpush2.bf16.msra.mxu0 0
        %899 = vmatprep.subr.bf16.mxu0 0
        %900 = vmatpush2.bf16.msra.mxu0 0
        %901 = vmatprep.mubr.bf16.mxu0 0
        %902 = vmatmul.mubr.bf16.gmra.mxu0 %v858
        %v903 = vpop.f32.mrf.mxu0
        %v904 = vadd.f32 0.0, %v903
        %v905 = vpop.f32.mrf.mxu0
        %v906 = vadd.f32 0.0, %v905
        %v907 = vpop.f32.mrf.mxu0
        %v908 = vadd.f32 0.0, %v907
        %v909 = vpop.f32.mrf.mxu0
        %v910 = vadd.f32 0.0, %v909
        %911 = vmatprep.mubr.bf16.mxu0 0
        %912 = vmatmul.mubr.bf16.gmra.mxu0 %v861
        %v913 = vpop.f32.mrf.mxu0
        %v914 = vadd.f32 0.0, %v913
        %v915 = vpop.f32.mrf.mxu0
        %v916 = vadd.f32 0.0, %v915
        %v917 = vpop.f32.mrf.mxu0
        %v918 = vpop.f32.mrf.mxu0
        %919 = vdwg.mxu0
        %v920 = vadd.f32 %v824, %v904
        %v921 = vadd.f32 %v825, %v906
        %v922 = vadd.f32 %v826, %v908
        %v923 = vadd.f32 %v827, %v910
        %v924 = vadd.f32 %v828, %v914
        %v925 = vadd.f32 %v829, %v916
        %v926 = vld [vmem:[%s2] sm:$0x3]
        %v928 = vlaneseq
        %v929 = vshrl.u32 %v928, 7
        %v930 = vsub.s32 0, %v929
        %v931 = vrot.slane %v926, %v930
        %v932 = vlaneseq
        %v933 = vshrl.u32 %v932, 7
        %v934 = vsub.s32 1, %v933
        %v935 = vrot.slane %v926, %v934
        %v938 = vadd.f32 %v920, %v931
        %v939 = vadd.f32 %v921, %v935
        %v940 = vadd.f32 %v922, %v931
        %v941 = vadd.f32 %v923, %v935
        %v942 = vadd.f32 %v924, %v931
        %v943 = vadd.f32 %v925, %v935
        %v944 = vmax.f32 %v938, 0.0
        %v945 = vmax.f32 %v939, 0.0
        %v946 = vmax.f32 %v940, 0.0
        %v947 = vmax.f32 %v941, 0.0
        %v948 = vmax.f32 %v942, 0.0
        %v949 = vmax.f32 %v943, 0.0
        %v950 = vld [vmem:[%s3] sm:$0xff]
        %v951 = vld [vmem:[%s3 + $0x8] sm:$0xf]
        %vm952 = vcmask 195584
        %v954 = vsel %vm952, %v950, 0
        %v957 = vsel %vm952, %v951, 0
        %959 = vmatprep.subr.mxu0 0.0
        %960 = vmatpush1.msra.mxu0 0.0
        %961 = vmatprep.subr.mxu0 0.0
        %962 = vmatpush1.msra.mxu0 0.0
        %963 = vmatprep.subr.mxu0 0.0
        %964 = vmatpush1.msra.mxu0 0.0
        %965 = vmatprep.subr.mxu0 0.0
        %966 = vmatpush1.msra.mxu0 0.0
        %967 = vmatprep.subr.mxu0 0.0
        %968 = vmatpush1.msra.mxu0 0.0
        %969 = vmatprep.subr.mxu0 0.0
        %970 = vmatpush1.msra.mxu0 0.0
        %971 = vmatprep.subr.mxu0 0.0
        %972 = vmatpush1.msra.mxu0 0.0
        %973 = vmatprep.subr.mxu0 0.0
        %974 = vmatpush1.msra.mxu0 0.0
        %975 = vmatprep.subr.mxu0 0.0
        %976 = vmatpush1.msra.mxu0 0.0
        %977 = vmatprep.subr.mxu0 0.0
        %978 = vmatpush1.msra.mxu0 0.0
        %979 = vmatprep.subr.mxu0 0.0
        %980 = vmatpush1.msra.mxu0 0.0
        %981 = vmatprep.subr.mxu0 0.0
        %982 = vmatpush1.msra.mxu0 0.0
        %983 = vmatprep.subr.mxu0 0.0
        %984 = vmatpush1.msra.mxu0 0.0
        %985 = vmatprep.subr.mxu0 %v949
        %986 = vmatpush1.msra.mxu0 %v948
        %987 = vmatprep.subr.mxu0 %v947
        %988 = vmatpush1.msra.mxu0 %v946
        %989 = vmatprep.subr.mxu0 %v945
        %990 = vmatpush1.msra.mxu0 %v944
        %991 = vmatprep.subr.mxu0 0.0
        %992 = vmatpush2.msra.mxu0 0.0
        %993 = vmatprep.subr.mxu0 0.0
        %994 = vmatpush2.msra.mxu0 0.0
        %995 = vmatprep.subr.mxu0 0.0
        %996 = vmatpush2.msra.mxu0 0.0
        %997 = vmatprep.subr.mxu0 0.0
        %998 = vmatpush2.msra.mxu0 0.0
        %999 = vmatprep.subr.mxu0 0.0
        %1000 = vmatpush2.msra.mxu0 0.0
        %1001 = vmatprep.subr.mxu0 0.0
        %1002 = vmatpush2.msra.mxu0 0.0
        %1003 = vmatprep.subr.mxu0 0.0
        %1004 = vmatpush2.msra.mxu0 0.0
        %1005 = vmatprep.subr.mxu0 0.0
        %1006 = vmatpush2.msra.mxu0 0.0
        %1007 = vmatprep.subr.mxu0 0.0
        %1008 = vmatpush2.msra.mxu0 0.0
        %1009 = vmatprep.subr.mxu0 0.0
        %1010 = vmatpush2.msra.mxu0 0.0
        %1011 = vmatprep.subr.mxu0 0.0
        %1012 = vmatpush2.msra.mxu0 0.0
        %1013 = vmatprep.subr.mxu0 0.0
        %1014 = vmatpush2.msra.mxu0 0.0
        %1015 = vmatprep.subr.mxu0 0.0
        %1016 = vmatpush2.msra.mxu0 0.0
        %1017 = vmatprep.subr.mxu0 0.0
        %1018 = vmatpush2.msra.mxu0 0.0
        %1019 = vmatprep.subr.mxu0 0.0
        %1020 = vmatpush2.msra.mxu0 0.0
        %1021 = vmatprep.subr.mxu0 0.0
        %1022 = vmatpush2.msra.mxu0 0.0
        %1023 = vmatprep.mubr.f32.mxu0 0.0
        %1024 = vmatmul.mubr.f32.gmra.mxu0 %v954
        %v1025 = vpop.f32.mrf.mxu0
        %v1026 = vadd.f32 0.0, %v1025
        %v1027 = vpop.f32.mrf.mxu0
        %v1028 = vadd.f32 0.0, %v1027
        %1029 = vmatprep.mubr.f32.mxu0 0.0
        %1030 = vmatmul.mubr.f32.gmra.mxu0 %v957
        %v1031 = vpop.f32.mrf.mxu0
        %v1032 = vadd.f32 0.0, %v1031
        %v1033 = vpop.f32.mrf.mxu0
        %v1034 = vadd.f32 0.0, %v1033
        %1035 = vdwg.mxu0
        %s1036 = scalar_lea.vmem %s3, 16
        %v1037 = vld [vmem:[%s1036] sm:$0xff]
        %v1038 = vld [vmem:[%s1036 + $0x8] sm:$0xf]
        %v1040 = vsel %vm952, %v1037, 0
        %v1043 = vsel %vm952, %v1038, 0
        %1045 = vmatprep.subr.mxu0 0.0
        %1046 = vmatpush1.msra.mxu0 0.0
        %1047 = vmatprep.subr.mxu0 0.0
        %1048 = vmatpush1.msra.mxu0 0.0
        %1049 = vmatprep.subr.mxu0 0.0
        %1050 = vmatpush1.msra.mxu0 0.0
        %1051 = vmatprep.subr.mxu0 0.0
        %1052 = vmatpush1.msra.mxu0 0.0
        %1053 = vmatprep.subr.mxu0 0.0
        %1054 = vmatpush1.msra.mxu0 0.0
        %1055 = vmatprep.subr.mxu0 0.0
        %1056 = vmatpush1.msra.mxu0 0.0
        %1057 = vmatprep.subr.mxu0 0.0
        %1058 = vmatpush1.msra.mxu0 0.0
        %1059 = vmatprep.subr.mxu0 0.0
        %1060 = vmatpush1.msra.mxu0 0.0
        %1061 = vmatprep.subr.mxu0 0.0
        %1062 = vmatpush1.msra.mxu0 0.0
        %1063 = vmatprep.subr.mxu0 0.0
        %1064 = vmatpush1.msra.mxu0 0.0
        %1065 = vmatprep.subr.mxu0 0.0
        %1066 = vmatpush1.msra.mxu0 0.0
        %1067 = vmatprep.subr.mxu0 0.0
        %1068 = vmatpush1.msra.mxu0 0.0
        %1069 = vmatprep.subr.mxu0 0.0
        %1070 = vmatpush1.msra.mxu0 0.0
        %1071 = vmatprep.subr.mxu0 %v949
        %1072 = vmatpush1.msra.mxu0 %v948
        %1073 = vmatprep.subr.mxu0 %v947
        %1074 = vmatpush1.msra.mxu0 %v946
        %1075 = vmatprep.subr.mxu0 %v945
        %1076 = vmatpush1.msra.mxu0 %v944
        %1077 = vmatprep.subr.mxu0 0.0
        %1078 = vmatpush2.msra.mxu0 0.0
        %1079 = vmatprep.subr.mxu0 0.0
        %1080 = vmatpush2.msra.mxu0 0.0
        %1081 = vmatprep.subr.mxu0 0.0
        %1082 = vmatpush2.msra.mxu0 0.0
        %1083 = vmatprep.subr.mxu0 0.0
        %1084 = vmatpush2.msra.mxu0 0.0
        %1085 = vmatprep.subr.mxu0 0.0
        %1086 = vmatpush2.msra.mxu0 0.0
        %1087 = vmatprep.subr.mxu0 0.0
        %1088 = vmatpush2.msra.mxu0 0.0
        %1089 = vmatprep.subr.mxu0 0.0
        %1090 = vmatpush2.msra.mxu0 0.0
        %1091 = vmatprep.subr.mxu0 0.0
        %1092 = vmatpush2.msra.mxu0 0.0
        %1093 = vmatprep.subr.mxu0 0.0
        %1094 = vmatpush2.msra.mxu0 0.0
        %1095 = vmatprep.subr.mxu0 0.0
        %1096 = vmatpush2.msra.mxu0 0.0
        %1097 = vmatprep.subr.mxu0 0.0
        %1098 = vmatpush2.msra.mxu0 0.0
        %1099 = vmatprep.subr.mxu0 0.0
        %1100 = vmatpush2.msra.mxu0 0.0
        %1101 = vmatprep.subr.mxu0 0.0
        %1102 = vmatpush2.msra.mxu0 0.0
        %1103 = vmatprep.subr.mxu0 0.0
        %1104 = vmatpush2.msra.mxu0 0.0
        %1105 = vmatprep.subr.mxu0 0.0
        %1106 = vmatpush2.msra.mxu0 0.0
        %1107 = vmatprep.subr.mxu0 0.0
        %1108 = vmatpush2.msra.mxu0 0.0
        %1109 = vmatprep.mubr.f32.mxu0 0.0
        %1110 = vmatmul.mubr.f32.gmra.mxu0 %v1040
        %v1111 = vpop.f32.mrf.mxu0
        %v1112 = vadd.f32 0.0, %v1111
        %v1113 = vpop.f32.mrf.mxu0
        %v1114 = vadd.f32 0.0, %v1113
        %1115 = vmatprep.mubr.f32.mxu0 0.0
        %1116 = vmatmul.mubr.f32.gmra.mxu0 %v1043
        %v1117 = vpop.f32.mrf.mxu0
        %v1118 = vadd.f32 0.0, %v1117
        %v1119 = vpop.f32.mrf.mxu0
        %v1120 = vadd.f32 0.0, %v1119
        %1121 = vdwg.mxu0
        %v1122 = vmax.f32 %v1026, %v1112
        %v1123 = vmax.f32 %v1028, %v1114
        %v1124 = vmax.f32 %v1032, %v1118
        %v1125 = vmax.f32 %v1034, %v1120
        %v1126 = vld [vmem:[%s4] sm:$0xff]
        %v1127 = vld [vmem:[%s4 + $0x8] sm:$0xff]
        %v1128 = vld [vmem:[%s4 + $0x10] sm:$0xff]
        %v1129 = vld [vmem:[%s4 + $0x18] sm:$0xff]
        %v1130 = vld [vmem:[%s4 + $0x20] sm:$0xff]
        %v1131 = vld [vmem:[%s4 + $0x28] sm:$0xff]
        %v1132 = vld [vmem:[%s4 + $0x30] sm:$0xff]
        %v1133 = vld [vmem:[%s4 + $0x38] sm:$0xff]
        %v1134 = vld [vmem:[%s4 + $0x40] sm:$0xff]
        %v1135 = vld [vmem:[%s4 + $0x48] sm:$0xff]
        %v1136 = vld [vmem:[%s4 + $0x50] sm:$0xff]
        %v1137 = vld [vmem:[%s4 + $0x58] sm:$0xff]
        %v1138 = vld [vmem:[%s4 + $0x60] sm:$0xff]
        %v1139 = vld [vmem:[%s4 + $0x68] sm:$0xff]
        %v1140 = vld [vmem:[%s4 + $0x70] sm:$0xff]
        %v1141 = vld [vmem:[%s4 + $0x78] sm:$0xff]
        %v1142 = vld [vmem:[%s4 + $0x80] sm:$0xff]
        %v1143 = vld [vmem:[%s4 + $0x88] sm:$0xff]
        %v1144 = vld [vmem:[%s4 + $0x90] sm:$0xff]
        %v1145 = vld [vmem:[%s4 + $0x98] sm:$0xff]
        %v1146 = vld [vmem:[%s4 + $0xa0] sm:$0xff]
        %v1147 = vld [vmem:[%s4 + $0xa8] sm:$0xff]
        %v1148 = vld [vmem:[%s4 + $0xb0] sm:$0xff]
        %v1149 = vld [vmem:[%s4 + $0xb8] sm:$0xff]
        %vm1150 = vcmask 523264
        %v1152 = vsel %vm1150, %v1123, 0
        %v1155 = vsel %vm1150, %v1125, 0
        %1157 = vmatprep.subr.mxu0 0.0
        %1158 = vmatpush1.msra.mxu0 %v1141
        %1159 = vmatprep.subr.mxu0 0.0
        %1160 = vmatpush1.msra.mxu0 %v1140
        %1161 = vmatprep.subr.mxu0 0.0
        %1162 = vmatpush1.msra.mxu0 %v1139
        %1163 = vmatprep.subr.mxu0 0.0
        %1164 = vmatpush1.msra.mxu0 %v1138
        %1165 = vmatprep.subr.mxu0 0.0
        %1166 = vmatpush1.msra.mxu0 %v1137
        %1167 = vmatprep.subr.mxu0 0.0
        %1168 = vmatpush1.msra.mxu0 %v1136
        %1169 = vmatprep.subr.mxu0 0.0
        %1170 = vmatpush1.msra.mxu0 %v1135
        %1171 = vmatprep.subr.mxu0 0.0
        %1172 = vmatpush1.msra.mxu0 %v1134
        %1173 = vmatprep.subr.mxu0 0.0
        %1174 = vmatpush1.msra.mxu0 %v1133
        %1175 = vmatprep.subr.mxu0 0.0
        %1176 = vmatpush1.msra.mxu0 %v1132
        %1177 = vmatprep.subr.mxu0 0.0
        %1178 = vmatpush1.msra.mxu0 %v1131
        %1179 = vmatprep.subr.mxu0 0.0
        %1180 = vmatpush1.msra.mxu0 %v1130
        %1181 = vmatprep.subr.mxu0 0.0
        %1182 = vmatpush1.msra.mxu0 %v1129
        %1183 = vmatprep.subr.mxu0 0.0
        %1184 = vmatpush1.msra.mxu0 %v1128
        %1185 = vmatprep.subr.mxu0 0.0
        %1186 = vmatpush1.msra.mxu0 %v1127
        %1187 = vmatprep.subr.mxu0 0.0
        %1188 = vmatpush1.msra.mxu0 %v1126
        %1189 = vmatprep.subr.mxu0 0.0
        %1190 = vmatpush2.msra.mxu0 0.0
        %1191 = vmatprep.subr.mxu0 0.0
        %1192 = vmatpush2.msra.mxu0 0.0
        %1193 = vmatprep.subr.mxu0 0.0
        %1194 = vmatpush2.msra.mxu0 0.0
        %1195 = vmatprep.subr.mxu0 0.0
        %1196 = vmatpush2.msra.mxu0 0.0
        %1197 = vmatprep.subr.mxu0 0.0
        %1198 = vmatpush2.msra.mxu0 0.0
        %1199 = vmatprep.subr.mxu0 0.0
        %1200 = vmatpush2.msra.mxu0 0.0
        %1201 = vmatprep.subr.mxu0 0.0
        %1202 = vmatpush2.msra.mxu0 0.0
        %1203 = vmatprep.subr.mxu0 0.0
        %1204 = vmatpush2.msra.mxu0 0.0
        %1205 = vmatprep.subr.mxu0 0.0
        %1206 = vmatpush2.msra.mxu0 %v1149
        %1207 = vmatprep.subr.mxu0 0.0
        %1208 = vmatpush2.msra.mxu0 %v1148
        %1209 = vmatprep.subr.mxu0 0.0
        %1210 = vmatpush2.msra.mxu0 %v1147
        %1211 = vmatprep.subr.mxu0 0.0
        %1212 = vmatpush2.msra.mxu0 %v1146
        %1213 = vmatprep.subr.mxu0 0.0
        %1214 = vmatpush2.msra.mxu0 %v1145
        %1215 = vmatprep.subr.mxu0 0.0
        %1216 = vmatpush2.msra.mxu0 %v1144
        %1217 = vmatprep.subr.mxu0 0.0
        %1218 = vmatpush2.msra.mxu0 %v1143
        %1219 = vmatprep.subr.mxu0 0.0
        %1220 = vmatpush2.msra.mxu0 %v1142
        %1221 = vmatprep.mubr.f32.mxu0 %v1152
        %1222 = vmatmul.mubr.f32.gmra.mxu0 %v1122
        %v1223 = vpop.f32.mrf.mxu0
        %v1224 = vadd.f32 0.0, %v1223
        %v1225 = vpop.f32.mrf.mxu0
        %1226 = vmatprep.mubr.f32.mxu0 %v1155
        %1227 = vmatmul.mubr.f32.gmra.mxu0 %v1124
        %v1228 = vpop.f32.mrf.mxu0
        %v1229 = vadd.f32 0.0, %v1228
        %v1230 = vpop.f32.mrf.mxu0
        %1231 = vdwg.mxu0
        %s1232 = scalar_lea.vmem %s4, 192
        %v1233 = vld [vmem:[%s1232] sm:$0xff]
        %v1234 = vld [vmem:[%s1232 + $0x8] sm:$0xff]
        %v1235 = vld [vmem:[%s1232 + $0x10] sm:$0xff]
        %v1236 = vld [vmem:[%s1232 + $0x18] sm:$0xff]
        %v1237 = vld [vmem:[%s1232 + $0x20] sm:$0xff]
        %v1238 = vld [vmem:[%s1232 + $0x28] sm:$0xff]
        %v1239 = vld [vmem:[%s1232 + $0x30] sm:$0xff]
        %v1240 = vld [vmem:[%s1232 + $0x38] sm:$0xff]
        %v1241 = vld [vmem:[%s1232 + $0x40] sm:$0xff]
        %v1242 = vld [vmem:[%s1232 + $0x48] sm:$0xff]
        %v1243 = vld [vmem:[%s1232 + $0x50] sm:$0xff]
        %v1244 = vld [vmem:[%s1232 + $0x58] sm:$0xff]
        %v1245 = vld [vmem:[%s1232 + $0x60] sm:$0xff]
        %v1246 = vld [vmem:[%s1232 + $0x68] sm:$0xff]
        %v1247 = vld [vmem:[%s1232 + $0x70] sm:$0xff]
        %v1248 = vld [vmem:[%s1232 + $0x78] sm:$0xff]
        %v1249 = vld [vmem:[%s1232 + $0x80] sm:$0xff]
        %v1250 = vld [vmem:[%s1232 + $0x88] sm:$0xff]
        %v1251 = vld [vmem:[%s1232 + $0x90] sm:$0xff]
        %v1252 = vld [vmem:[%s1232 + $0x98] sm:$0xff]
        %v1253 = vld [vmem:[%s1232 + $0xa0] sm:$0xff]
        %v1254 = vld [vmem:[%s1232 + $0xa8] sm:$0xff]
        %v1255 = vld [vmem:[%s1232 + $0xb0] sm:$0xff]
        %v1256 = vld [vmem:[%s1232 + $0xb8] sm:$0xff]
        %1257 = vmatprep.subr.mxu0 0.0
        %1258 = vmatpush1.msra.mxu0 %v1248
        %1259 = vmatprep.subr.mxu0 0.0
        %1260 = vmatpush1.msra.mxu0 %v1247
        %1261 = vmatprep.subr.mxu0 0.0
        %1262 = vmatpush1.msra.mxu0 %v1246
        %1263 = vmatprep.subr.mxu0 0.0
        %1264 = vmatpush1.msra.mxu0 %v1245
        %1265 = vmatprep.subr.mxu0 0.0
        %1266 = vmatpush1.msra.mxu0 %v1244
        %1267 = vmatprep.subr.mxu0 0.0
        %1268 = vmatpush1.msra.mxu0 %v1243
        %1269 = vmatprep.subr.mxu0 0.0
        %1270 = vmatpush1.msra.mxu0 %v1242
        %1271 = vmatprep.subr.mxu0 0.0
        %1272 = vmatpush1.msra.mxu0 %v1241
        %1273 = vmatprep.subr.mxu0 0.0
        %1274 = vmatpush1.msra.mxu0 %v1240
        %1275 = vmatprep.subr.mxu0 0.0
        %1276 = vmatpush1.msra.mxu0 %v1239
        %1277 = vmatprep.subr.mxu0 0.0
        %1278 = vmatpush1.msra.mxu0 %v1238
        %1279 = vmatprep.subr.mxu0 0.0
        %1280 = vmatpush1.msra.mxu0 %v1237
        %1281 = vmatprep.subr.mxu0 0.0
        %1282 = vmatpush1.msra.mxu0 %v1236
        %1283 = vmatprep.subr.mxu0 0.0
        %1284 = vmatpush1.msra.mxu0 %v1235
        %1285 = vmatprep.subr.mxu0 0.0
        %1286 = vmatpush1.msra.mxu0 %v1234
        %1287 = vmatprep.subr.mxu0 0.0
        %1288 = vmatpush1.msra.mxu0 %v1233
        %1289 = vmatprep.subr.mxu0 0.0
        %1290 = vmatpush2.msra.mxu0 0.0
        %1291 = vmatprep.subr.mxu0 0.0
        %1292 = vmatpush2.msra.mxu0 0.0
        %1293 = vmatprep.subr.mxu0 0.0
        %1294 = vmatpush2.msra.mxu0 0.0
        %1295 = vmatprep.subr.mxu0 0.0
        %1296 = vmatpush2.msra.mxu0 0.0
        %1297 = vmatprep.subr.mxu0 0.0
        %1298 = vmatpush2.msra.mxu0 0.0
        %1299 = vmatprep.subr.mxu0 0.0
        %1300 = vmatpush2.msra.mxu0 0.0
        %1301 = vmatprep.subr.mxu0 0.0
        %1302 = vmatpush2.msra.mxu0 0.0
        %1303 = vmatprep.subr.mxu0 0.0
        %1304 = vmatpush2.msra.mxu0 0.0
        %1305 = vmatprep.subr.mxu0 0.0
        %1306 = vmatpush2.msra.mxu0 %v1256
        %1307 = vmatprep.subr.mxu0 0.0
        %1308 = vmatpush2.msra.mxu0 %v1255
        %1309 = vmatprep.subr.mxu0 0.0
        %1310 = vmatpush2.msra.mxu0 %v1254
        %1311 = vmatprep.subr.mxu0 0.0
        %1312 = vmatpush2.msra.mxu0 %v1253
        %1313 = vmatprep.subr.mxu0 0.0
        %1314 = vmatpush2.msra.mxu0 %v1252
        %1315 = vmatprep.subr.mxu0 0.0
        %1316 = vmatpush2.msra.mxu0 %v1251
        %1317 = vmatprep.subr.mxu0 0.0
        %1318 = vmatpush2.msra.mxu0 %v1250
        %1319 = vmatprep.subr.mxu0 0.0
        %1320 = vmatpush2.msra.mxu0 %v1249
        %1321 = vmatprep.mubr.f32.mxu0 %v1152
        %1322 = vmatmul.mubr.f32.gmra.mxu0 %v1122
        %v1323 = vpop.f32.mrf.mxu0
        %v1324 = vadd.f32 0.0, %v1323
        %v1325 = vpop.f32.mrf.mxu0
        %1326 = vmatprep.mubr.f32.mxu0 %v1155
        %1327 = vmatmul.mubr.f32.gmra.mxu0 %v1124
        %v1328 = vpop.f32.mrf.mxu0
        %v1329 = vadd.f32 0.0, %v1328
        %v1330 = vpop.f32.mrf.mxu0
        %1331 = vdwg.mxu0
        %v1332 = vmax.f32 %v1224, %v1324
        %v1333 = vmax.f32 %v1229, %v1329
        %v1334 = vpack.c.bf16 %v1333, %v1332
        %v1335 = vld [vmem:[%s5] sm:$0xf]
        %v1336 = vld [vmem:[%s5 + $0x4] sm:$0xf]
        %v1337 = vld [vmem:[%s5 + $0x8] sm:$0xf]
        %v1338 = vld [vmem:[%s5 + $0xc] sm:$0xf]
        %v1339 = vld [vmem:[%s5 + $0x10] sm:$0xf]
        %v1340 = vld [vmem:[%s5 + $0x14] sm:$0xf]
        %v1341 = vld [vmem:[%s5 + $0x18] sm:$0xf]
        %v1342 = vld [vmem:[%s5 + $0x1c] sm:$0xf]
        %v1343 = vld [vmem:[%s5 + $0x20] sm:$0xf]
        %v1344 = vld [vmem:[%s5 + $0x24] sm:$0xf]
        %v1345 = vld [vmem:[%s5 + $0x28] sm:$0xf]
        %v1346 = vld [vmem:[%s5 + $0x2c] sm:$0xf]
        %s1347 = scalar_lea.vmem %s5, 48
        %v1348 = vld [vmem:[%s1347] sm:$0xf]
        %v1349 = vld [vmem:[%s1347 + $0x4] sm:$0xf]
        %v1350 = vld [vmem:[%s1347 + $0x8] sm:$0xf]
        %v1351 = vld [vmem:[%s1347 + $0xc] sm:$0xf]
        %v1352 = vld [vmem:[%s1347 + $0x10] sm:$0xf]
        %v1353 = vld [vmem:[%s1347 + $0x14] sm:$0xf]
        %v1354 = vld [vmem:[%s1347 + $0x18] sm:$0xf]
        %v1355 = vld [vmem:[%s1347 + $0x1c] sm:$0xf]
        %v1356 = vld [vmem:[%s1347 + $0x20] sm:$0xf]
        %v1357 = vld [vmem:[%s1347 + $0x24] sm:$0xf]
        %v1358 = vld [vmem:[%s1347 + $0x28] sm:$0xf]
        %v1359 = vld [vmem:[%s1347 + $0x2c] sm:$0xf]
        %v1361 = vshrl.u32 %v1334, 16
        %v1363 = vshll.u32 %v1334, 16
        %v1365 = vrot.slane %v1363, 1
        %v1366 = vor.u32 %v1361, %v1365
        %v1379 = vunpack.c.l.b16 %v1348
        %v1380 = vunpack.c.l.b16 %v1349
        %v1381 = vunpack.c.l.b16 %v1350
        %v1382 = vunpack.c.l.b16 %v1351
        %v1383 = vunpack.c.l.b16 %v1352
        %v1384 = vunpack.c.l.b16 %v1353
        %v1385 = vunpack.c.l.b16 %v1354
        %v1386 = vunpack.c.l.b16 %v1355
        %v1387 = vunpack.c.l.b16 %v1356
        %v1388 = vunpack.c.l.b16 %v1357
        %v1389 = vunpack.c.l.b16 %v1358
        %v1390 = vunpack.c.l.b16 %v1359
        %v1391 = vpack.c.b16 %v1380, %v1379
        %v1392 = vpack.c.b16 %v1382, %v1381
        %v1393 = vpack.c.b16 %v1384, %v1383
        %v1394 = vpack.c.b16 %v1386, %v1385
        %v1395 = vpack.c.b16 %v1388, %v1387
        %v1396 = vpack.c.b16 %v1390, %v1389
        %vm1403 = vcmask 785408
        %v1405 = vsel %vm1403, %v1366, 0
        %1407 = vmatprep.subr.bf16.mxu0 0
        %1408 = vmatpush1.bf16.msra.mxu0 0
        %1409 = vmatprep.subr.bf16.mxu0 0
        %1410 = vmatpush1.bf16.msra.mxu0 0
        %1411 = vmatprep.subr.bf16.mxu0 0
        %1412 = vmatpush1.bf16.msra.mxu0 %v1396
        %1413 = vmatprep.subr.bf16.mxu0 0
        %1414 = vmatpush1.bf16.msra.mxu0 %v1395
        %1415 = vmatprep.subr.bf16.mxu0 0
        %1416 = vmatpush1.bf16.msra.mxu0 %v1394
        %1417 = vmatprep.subr.bf16.mxu0 0
        %1418 = vmatpush1.bf16.msra.mxu0 %v1393
        %1419 = vmatprep.subr.bf16.mxu0 0
        %1420 = vmatpush1.bf16.msra.mxu0 %v1392
        %1421 = vmatprep.subr.bf16.mxu0 0
        %1422 = vmatpush1.bf16.msra.mxu0 %v1391
        %1423 = vmatprep.subr.bf16.mxu0 0
        %1424 = vmatpush2.bf16.msra.mxu0 0
        %1425 = vmatprep.subr.bf16.mxu0 0
        %1426 = vmatpush2.bf16.msra.mxu0 0
        %1427 = vmatprep.subr.bf16.mxu0 0
        %1428 = vmatpush2.bf16.msra.mxu0 0
        %1429 = vmatprep.subr.bf16.mxu0 0
        %1430 = vmatpush2.bf16.msra.mxu0 0
        %1431 = vmatprep.subr.bf16.mxu0 0
        %1432 = vmatpush2.bf16.msra.mxu0 0
        %1433 = vmatprep.subr.bf16.mxu0 0
        %1434 = vmatpush2.bf16.msra.mxu0 0
        %1435 = vmatprep.subr.bf16.mxu0 0
        %1436 = vmatpush2.bf16.msra.mxu0 0
        %1437 = vmatprep.subr.bf16.mxu0 0
        %1438 = vmatpush2.bf16.msra.mxu0 0
        %1439 = vmatprep.mubr.bf16.mxu0 0
        %1440 = vmatmul.mubr.bf16.gmra.mxu0 %v1405
        %v1441 = vpop.f32.mrf.mxu0
        %v1442 = vadd.f32 0.0, %v1441
        %v1443 = vpop.f32.mrf.mxu0
        %v1444 = vpop.f32.mrf.mxu0
        %v1445 = vpop.f32.mrf.mxu0
        %1446 = vdwg.mxu0
        %v1459 = vunpack.c.l.b16 %v1335
        %v1460 = vunpack.c.l.b16 %v1336
        %v1461 = vunpack.c.l.b16 %v1337
        %v1462 = vunpack.c.l.b16 %v1338
        %v1463 = vunpack.c.l.b16 %v1339
        %v1464 = vunpack.c.l.b16 %v1340
        %v1465 = vunpack.c.l.b16 %v1341
        %v1466 = vunpack.c.l.b16 %v1342
        %v1467 = vunpack.c.l.b16 %v1343
        %v1468 = vunpack.c.l.b16 %v1344
        %v1469 = vunpack.c.l.b16 %v1345
        %v1470 = vunpack.c.l.b16 %v1346
        %v1471 = vpack.c.b16 %v1460, %v1459
        %v1472 = vpack.c.b16 %v1462, %v1461
        %v1473 = vpack.c.b16 %v1464, %v1463
        %v1474 = vpack.c.b16 %v1466, %v1465
        %v1475 = vpack.c.b16 %v1468, %v1467
        %v1476 = vpack.c.b16 %v1470, %v1469
        %v1483 = vsel %vm1403, %v1334, 0
        %1485 = vmatprep.subr.bf16.mxu0 0
        %1486 = vmatpush1.bf16.msra.mxu0 0
        %1487 = vmatprep.subr.bf16.mxu0 0
        %1488 = vmatpush1.bf16.msra.mxu0 0
        %1489 = vmatprep.subr.bf16.mxu0 0
        %1490 = vmatpush1.bf16.msra.mxu0 %v1476
        %1491 = vmatprep.subr.bf16.mxu0 0
        %1492 = vmatpush1.bf16.msra.mxu0 %v1475
        %1493 = vmatprep.subr.bf16.mxu0 0
        %1494 = vmatpush1.bf16.msra.mxu0 %v1474
        %1495 = vmatprep.subr.bf16.mxu0 0
        %1496 = vmatpush1.bf16.msra.mxu0 %v1473
        %1497 = vmatprep.subr.bf16.mxu0 0
        %1498 = vmatpush1.bf16.msra.mxu0 %v1472
        %1499 = vmatprep.subr.bf16.mxu0 0
        %1500 = vmatpush1.bf16.msra.mxu0 %v1471
        %1501 = vmatprep.subr.bf16.mxu0 0
        %1502 = vmatpush2.bf16.msra.mxu0 0
        %1503 = vmatprep.subr.bf16.mxu0 0
        %1504 = vmatpush2.bf16.msra.mxu0 0
        %1505 = vmatprep.subr.bf16.mxu0 0
        %1506 = vmatpush2.bf16.msra.mxu0 0
        %1507 = vmatprep.subr.bf16.mxu0 0
        %1508 = vmatpush2.bf16.msra.mxu0 0
        %1509 = vmatprep.subr.bf16.mxu0 0
        %1510 = vmatpush2.bf16.msra.mxu0 0
        %1511 = vmatprep.subr.bf16.mxu0 0
        %1512 = vmatpush2.bf16.msra.mxu0 0
        %1513 = vmatprep.subr.bf16.mxu0 0
        %1514 = vmatpush2.bf16.msra.mxu0 0
        %1515 = vmatprep.subr.bf16.mxu0 0
        %1516 = vmatpush2.bf16.msra.mxu0 0
        %1517 = vmatprep.mubr.bf16.mxu0 0
        %1518 = vmatmul.mubr.bf16.gmra.mxu0 %v1483
        %v1519 = vpop.f32.mrf.mxu0
        %v1520 = vadd.f32 %v1442, %v1519
        %v1521 = vpop.f32.mrf.mxu0
        %v1522 = vpop.f32.mrf.mxu0
        %v1523 = vpop.f32.mrf.mxu0
        %1524 = vdwg.mxu0
        %s1525 = scalar_lea.vmem %s5, 96
        %v1526 = vld [vmem:[%s1525] sm:$0xf]
        %v1527 = vld [vmem:[%s1525 + $0x4] sm:$0xf]
        %v1528 = vld [vmem:[%s1525 + $0x8] sm:$0xf]
        %v1529 = vld [vmem:[%s1525 + $0xc] sm:$0xf]
        %v1530 = vld [vmem:[%s1525 + $0x10] sm:$0xf]
        %v1531 = vld [vmem:[%s1525 + $0x14] sm:$0xf]
        %v1532 = vld [vmem:[%s1525 + $0x18] sm:$0xf]
        %v1533 = vld [vmem:[%s1525 + $0x1c] sm:$0xf]
        %v1534 = vld [vmem:[%s1525 + $0x20] sm:$0xf]
        %v1535 = vld [vmem:[%s1525 + $0x24] sm:$0xf]
        %v1536 = vld [vmem:[%s1525 + $0x28] sm:$0xf]
        %v1537 = vld [vmem:[%s1525 + $0x2c] sm:$0xf]
        %v1539 = vrot.slane %v1334, 1
        %v1552 = vunpack.c.l.b16 %v1526
        %v1553 = vunpack.c.l.b16 %v1527
        %v1554 = vunpack.c.l.b16 %v1528
        %v1555 = vunpack.c.l.b16 %v1529
        %v1556 = vunpack.c.l.b16 %v1530
        %v1557 = vunpack.c.l.b16 %v1531
        %v1558 = vunpack.c.l.b16 %v1532
        %v1559 = vunpack.c.l.b16 %v1533
        %v1560 = vunpack.c.l.b16 %v1534
        %v1561 = vunpack.c.l.b16 %v1535
        %v1562 = vunpack.c.l.b16 %v1536
        %v1563 = vunpack.c.l.b16 %v1537
        %v1564 = vpack.c.b16 %v1553, %v1552
        %v1565 = vpack.c.b16 %v1555, %v1554
        %v1566 = vpack.c.b16 %v1557, %v1556
        %v1567 = vpack.c.b16 %v1559, %v1558
        %v1568 = vpack.c.b16 %v1561, %v1560
        %v1569 = vpack.c.b16 %v1563, %v1562
        %v1577 = vsel %vm1403, %v1539, 0
        %1579 = vmatprep.subr.bf16.mxu0 0
        %1580 = vmatpush1.bf16.msra.mxu0 0
        %1581 = vmatprep.subr.bf16.mxu0 0
        %1582 = vmatpush1.bf16.msra.mxu0 0
        %1583 = vmatprep.subr.bf16.mxu0 0
        %1584 = vmatpush1.bf16.msra.mxu0 %v1569
        %1585 = vmatprep.subr.bf16.mxu0 0
        %1586 = vmatpush1.bf16.msra.mxu0 %v1568
        %1587 = vmatprep.subr.bf16.mxu0 0
        %1588 = vmatpush1.bf16.msra.mxu0 %v1567
        %1589 = vmatprep.subr.bf16.mxu0 0
        %1590 = vmatpush1.bf16.msra.mxu0 %v1566
        %1591 = vmatprep.subr.bf16.mxu0 0
        %1592 = vmatpush1.bf16.msra.mxu0 %v1565
        %1593 = vmatprep.subr.bf16.mxu0 0
        %1594 = vmatpush1.bf16.msra.mxu0 %v1564
        %1595 = vmatprep.subr.bf16.mxu0 0
        %1596 = vmatpush2.bf16.msra.mxu0 0
        %1597 = vmatprep.subr.bf16.mxu0 0
        %1598 = vmatpush2.bf16.msra.mxu0 0
        %1599 = vmatprep.subr.bf16.mxu0 0
        %1600 = vmatpush2.bf16.msra.mxu0 0
        %1601 = vmatprep.subr.bf16.mxu0 0
        %1602 = vmatpush2.bf16.msra.mxu0 0
        %1603 = vmatprep.subr.bf16.mxu0 0
        %1604 = vmatpush2.bf16.msra.mxu0 0
        %1605 = vmatprep.subr.bf16.mxu0 0
        %1606 = vmatpush2.bf16.msra.mxu0 0
        %1607 = vmatprep.subr.bf16.mxu0 0
        %1608 = vmatpush2.bf16.msra.mxu0 0
        %1609 = vmatprep.subr.bf16.mxu0 0
        %1610 = vmatpush2.bf16.msra.mxu0 0
        %1611 = vmatprep.mubr.bf16.mxu0 0
        %1612 = vmatmul.mubr.bf16.gmra.mxu0 %v1577
        %v1613 = vpop.f32.mrf.mxu0
        %v1614 = vadd.f32 0.0, %v1613
        %v1615 = vpop.f32.mrf.mxu0
        %v1616 = vpop.f32.mrf.mxu0
        %v1617 = vpop.f32.mrf.mxu0
        %1618 = vdwg.mxu0
        %v1619 = vadd.f32 %v1520, %v1614
        %s1620 = scalar_lea.vmem %s5, 144
        %v1621 = vld [vmem:[%s1620] sm:$0xf]
        %v1622 = vld [vmem:[%s1620 + $0x4] sm:$0xf]
        %v1623 = vld [vmem:[%s1620 + $0x8] sm:$0xf]
        %v1624 = vld [vmem:[%s1620 + $0xc] sm:$0xf]
        %v1625 = vld [vmem:[%s1620 + $0x10] sm:$0xf]
        %v1626 = vld [vmem:[%s1620 + $0x14] sm:$0xf]
        %v1627 = vld [vmem:[%s1620 + $0x18] sm:$0xf]
        %v1628 = vld [vmem:[%s1620 + $0x1c] sm:$0xf]
        %v1629 = vld [vmem:[%s1620 + $0x20] sm:$0xf]
        %v1630 = vld [vmem:[%s1620 + $0x24] sm:$0xf]
        %v1631 = vld [vmem:[%s1620 + $0x28] sm:$0xf]
        %v1632 = vld [vmem:[%s1620 + $0x2c] sm:$0xf]
        %v1633 = vrot.slane %v1361, 1
        %v1634 = vrot.slane %v1363, 2
        %v1635 = vor.u32 %v1633, %v1634
        %v1648 = vunpack.c.l.b16 %v1621
        %v1649 = vunpack.c.l.b16 %v1622
        %v1650 = vunpack.c.l.b16 %v1623
        %v1651 = vunpack.c.l.b16 %v1624
        %v1652 = vunpack.c.l.b16 %v1625
        %v1653 = vunpack.c.l.b16 %v1626
        %v1654 = vunpack.c.l.b16 %v1627
        %v1655 = vunpack.c.l.b16 %v1628
        %v1656 = vunpack.c.l.b16 %v1629
        %v1657 = vunpack.c.l.b16 %v1630
        %v1658 = vunpack.c.l.b16 %v1631
        %v1659 = vunpack.c.l.b16 %v1632
        %v1660 = vpack.c.b16 %v1649, %v1648
        %v1661 = vpack.c.b16 %v1651, %v1650
        %v1662 = vpack.c.b16 %v1653, %v1652
        %v1663 = vpack.c.b16 %v1655, %v1654
        %v1664 = vpack.c.b16 %v1657, %v1656
        %v1665 = vpack.c.b16 %v1659, %v1658
        %v1673 = vsel %vm1403, %v1635, 0
        %1675 = vmatprep.subr.bf16.mxu0 0
        %1676 = vmatpush1.bf16.msra.mxu0 0
        %1677 = vmatprep.subr.bf16.mxu0 0
        %1678 = vmatpush1.bf16.msra.mxu0 0
        %1679 = vmatprep.subr.bf16.mxu0 0
        %1680 = vmatpush1.bf16.msra.mxu0 %v1665
        %1681 = vmatprep.subr.bf16.mxu0 0
        %1682 = vmatpush1.bf16.msra.mxu0 %v1664
        %1683 = vmatprep.subr.bf16.mxu0 0
        %1684 = vmatpush1.bf16.msra.mxu0 %v1663
        %1685 = vmatprep.subr.bf16.mxu0 0
        %1686 = vmatpush1.bf16.msra.mxu0 %v1662
        %1687 = vmatprep.subr.bf16.mxu0 0
        %1688 = vmatpush1.bf16.msra.mxu0 %v1661
        %1689 = vmatprep.subr.bf16.mxu0 0
        %1690 = vmatpush1.bf16.msra.mxu0 %v1660
        %1691 = vmatprep.subr.bf16.mxu0 0
        %1692 = vmatpush2.bf16.msra.mxu0 0
        %1693 = vmatprep.subr.bf16.mxu0 0
        %1694 = vmatpush2.bf16.msra.mxu0 0
        %1695 = vmatprep.subr.bf16.mxu0 0
        %1696 = vmatpush2.bf16.msra.mxu0 0
        %1697 = vmatprep.subr.bf16.mxu0 0
        %1698 = vmatpush2.bf16.msra.mxu0 0
        %1699 = vmatprep.subr.bf16.mxu0 0
        %1700 = vmatpush2.bf16.msra.mxu0 0
        %1701 = vmatprep.subr.bf16.mxu0 0
        %1702 = vmatpush2.bf16.msra.mxu0 0
        %1703 = vmatprep.subr.bf16.mxu0 0
        %1704 = vmatpush2.bf16.msra.mxu0 0
        %1705 = vmatprep.subr.bf16.mxu0 0
        %1706 = vmatpush2.bf16.msra.mxu0 0
        %1707 = vmatprep.mubr.bf16.mxu0 0
        %1708 = vmatmul.mubr.bf16.gmra.mxu0 %v1673
        %v1709 = vpop.f32.mrf.mxu0
        %v1710 = vadd.f32 0.0, %v1709
        %v1711 = vpop.f32.mrf.mxu0
        %v1712 = vpop.f32.mrf.mxu0
        %v1713 = vpop.f32.mrf.mxu0
        %1714 = vdwg.mxu0
        %v1715 = vadd.f32 %v1619, %v1710
        %s1716 = scalar_lea.vmem %s5, 192
        %v1717 = vld [vmem:[%s1716] sm:$0xf]
        %v1718 = vld [vmem:[%s1716 + $0x4] sm:$0xf]
        %v1719 = vld [vmem:[%s1716 + $0x8] sm:$0xf]
        %v1720 = vld [vmem:[%s1716 + $0xc] sm:$0xf]
        %v1721 = vld [vmem:[%s1716 + $0x10] sm:$0xf]
        %v1722 = vld [vmem:[%s1716 + $0x14] sm:$0xf]
        %v1723 = vld [vmem:[%s1716 + $0x18] sm:$0xf]
        %v1724 = vld [vmem:[%s1716 + $0x1c] sm:$0xf]
        %v1725 = vld [vmem:[%s1716 + $0x20] sm:$0xf]
        %v1726 = vld [vmem:[%s1716 + $0x24] sm:$0xf]
        %v1727 = vld [vmem:[%s1716 + $0x28] sm:$0xf]
        %v1728 = vld [vmem:[%s1716 + $0x2c] sm:$0xf]
        %v1729 = vrot.slane %v1334, 2
        %v1742 = vunpack.c.l.b16 %v1717
        %v1743 = vunpack.c.l.b16 %v1718
        %v1744 = vunpack.c.l.b16 %v1719
        %v1745 = vunpack.c.l.b16 %v1720
        %v1746 = vunpack.c.l.b16 %v1721
        %v1747 = vunpack.c.l.b16 %v1722
        %v1748 = vunpack.c.l.b16 %v1723
        %v1749 = vunpack.c.l.b16 %v1724
        %v1750 = vunpack.c.l.b16 %v1725
        %v1751 = vunpack.c.l.b16 %v1726
        %v1752 = vunpack.c.l.b16 %v1727
        %v1753 = vunpack.c.l.b16 %v1728
        %v1754 = vpack.c.b16 %v1743, %v1742
        %v1755 = vpack.c.b16 %v1745, %v1744
        %v1756 = vpack.c.b16 %v1747, %v1746
        %v1757 = vpack.c.b16 %v1749, %v1748
        %v1758 = vpack.c.b16 %v1751, %v1750
        %v1759 = vpack.c.b16 %v1753, %v1752
        %v1767 = vsel %vm1403, %v1729, 0
        %1769 = vmatprep.subr.bf16.mxu0 0
        %1770 = vmatpush1.bf16.msra.mxu0 0
        %1771 = vmatprep.subr.bf16.mxu0 0
        %1772 = vmatpush1.bf16.msra.mxu0 0
        %1773 = vmatprep.subr.bf16.mxu0 0
        %1774 = vmatpush1.bf16.msra.mxu0 %v1759
        %1775 = vmatprep.subr.bf16.mxu0 0
        %1776 = vmatpush1.bf16.msra.mxu0 %v1758
        %1777 = vmatprep.subr.bf16.mxu0 0
        %1778 = vmatpush1.bf16.msra.mxu0 %v1757
        %1779 = vmatprep.subr.bf16.mxu0 0
        %1780 = vmatpush1.bf16.msra.mxu0 %v1756
        %1781 = vmatprep.subr.bf16.mxu0 0
        %1782 = vmatpush1.bf16.msra.mxu0 %v1755
        %1783 = vmatprep.subr.bf16.mxu0 0
        %1784 = vmatpush1.bf16.msra.mxu0 %v1754
        %1785 = vmatprep.subr.bf16.mxu0 0
        %1786 = vmatpush2.bf16.msra.mxu0 0
        %1787 = vmatprep.subr.bf16.mxu0 0
        %1788 = vmatpush2.bf16.msra.mxu0 0
        %1789 = vmatprep.subr.bf16.mxu0 0
        %1790 = vmatpush2.bf16.msra.mxu0 0
        %1791 = vmatprep.subr.bf16.mxu0 0
        %1792 = vmatpush2.bf16.msra.mxu0 0
        %1793 = vmatprep.subr.bf16.mxu0 0
        %1794 = vmatpush2.bf16.msra.mxu0 0
        %1795 = vmatprep.subr.bf16.mxu0 0
        %1796 = vmatpush2.bf16.msra.mxu0 0
        %1797 = vmatprep.subr.bf16.mxu0 0
        %1798 = vmatpush2.bf16.msra.mxu0 0
        %1799 = vmatprep.subr.bf16.mxu0 0
        %1800 = vmatpush2.bf16.msra.mxu0 0
        %1801 = vmatprep.mubr.bf16.mxu0 0
        %1802 = vmatmul.mubr.bf16.gmra.mxu0 %v1767
        %v1803 = vpop.f32.mrf.mxu0
        %v1804 = vadd.f32 0.0, %v1803
        %v1805 = vpop.f32.mrf.mxu0
        %v1806 = vpop.f32.mrf.mxu0
        %v1807 = vpop.f32.mrf.mxu0
        %1808 = vdwg.mxu0
        %v1809 = vadd.f32 %v1715, %v1804
        %v1810 = vld [vmem:[%s6] sm:$0x1]
        %v1812 = vlaneseq
        %v1813 = vshrl.u32 %v1812, 7
        %v1814 = vsub.s32 0, %v1813
        %v1815 = vrot.slane %v1810, %v1814
        %v1817 = vadd.f32 %v1809, %v1815
        %v1818 = vmax.f32 %v1817, 0.0
        %v1819 = vld [vmem:[%s7] sm:$0xf]
        %vm1820 = vcmask 64512
        %v1822 = vsel %vm1820, %v1819, 0
        %1824 = vmatprep.subr.mxu0 0.0
        %1825 = vmatpush1.msra.mxu0 0.0
        %1826 = vmatprep.subr.mxu0 0.0
        %1827 = vmatpush1.msra.mxu0 0.0
        %1828 = vmatprep.subr.mxu0 0.0
        %1829 = vmatpush1.msra.mxu0 0.0
        %1830 = vmatprep.subr.mxu0 0.0
        %1831 = vmatpush1.msra.mxu0 0.0
        %1832 = vmatprep.subr.mxu0 0.0
        %1833 = vmatpush1.msra.mxu0 0.0
        %1834 = vmatprep.subr.mxu0 0.0
        %1835 = vmatpush1.msra.mxu0 0.0
        %1836 = vmatprep.subr.mxu0 0.0
        %1837 = vmatpush1.msra.mxu0 0.0
        %1838 = vmatprep.subr.mxu0 0.0
        %1839 = vmatpush1.msra.mxu0 0.0
        %1840 = vmatprep.subr.mxu0 0.0
        %1841 = vmatpush1.msra.mxu0 0.0
        %1842 = vmatprep.subr.mxu0 0.0
        %1843 = vmatpush1.msra.mxu0 0.0
        %1844 = vmatprep.subr.mxu0 0.0
        %1845 = vmatpush1.msra.mxu0 0.0
        %1846 = vmatprep.subr.mxu0 0.0
        %1847 = vmatpush1.msra.mxu0 0.0
        %1848 = vmatprep.subr.mxu0 0.0
        %1849 = vmatpush1.msra.mxu0 0.0
        %1850 = vmatprep.subr.mxu0 0.0
        %1851 = vmatpush1.msra.mxu0 0.0
        %1852 = vmatprep.subr.mxu0 0.0
        %1853 = vmatpush1.msra.mxu0 0.0
        %1854 = vmatprep.subr.mxu0 0.0
        %1855 = vmatpush1.msra.mxu0 %v1818
        %1856 = vmatprep.subr.mxu0 0.0
        %1857 = vmatpush2.msra.mxu0 0.0
        %1858 = vmatprep.subr.mxu0 0.0
        %1859 = vmatpush2.msra.mxu0 0.0
        %1860 = vmatprep.subr.mxu0 0.0
        %1861 = vmatpush2.msra.mxu0 0.0
        %1862 = vmatprep.subr.mxu0 0.0
        %1863 = vmatpush2.msra.mxu0 0.0
        %1864 = vmatprep.subr.mxu0 0.0
        %1865 = vmatpush2.msra.mxu0 0.0
        %1866 = vmatprep.subr.mxu0 0.0
        %1867 = vmatpush2.msra.mxu0 0.0
        %1868 = vmatprep.subr.mxu0 0.0
        %1869 = vmatpush2.msra.mxu0 0.0
        %1870 = vmatprep.subr.mxu0 0.0
        %1871 = vmatpush2.msra.mxu0 0.0
        %1872 = vmatprep.subr.mxu0 0.0
        %1873 = vmatpush2.msra.mxu0 0.0
        %1874 = vmatprep.subr.mxu0 0.0
        %1875 = vmatpush2.msra.mxu0 0.0
        %1876 = vmatprep.subr.mxu0 0.0
        %1877 = vmatpush2.msra.mxu0 0.0
        %1878 = vmatprep.subr.mxu0 0.0
        %1879 = vmatpush2.msra.mxu0 0.0
        %1880 = vmatprep.subr.mxu0 0.0
        %1881 = vmatpush2.msra.mxu0 0.0
        %1882 = vmatprep.subr.mxu0 0.0
        %1883 = vmatpush2.msra.mxu0 0.0
        %1884 = vmatprep.subr.mxu0 0.0
        %1885 = vmatpush2.msra.mxu0 0.0
        %1886 = vmatprep.subr.mxu0 0.0
        %1887 = vmatpush2.msra.mxu0 0.0
        %1888 = vmatprep.mubr.f32.mxu0 0.0
        %1889 = vmatmul.mubr.f32.gmra.mxu0 %v1822
        %v1890 = vpop.f32.mrf.mxu0
        %v1891 = vadd.f32 0.0, %v1890
        %v1892 = vpop.f32.mrf.mxu0
        %1893 = vdwg.mxu0
        %s1894 = scalar_lea.vmem %s7, 4
        %v1895 = vld [vmem:[%s1894] sm:$0xf]
        %v1897 = vsel %vm1820, %v1895, 0
        %1899 = vmatprep.subr.mxu0 0.0
        %1900 = vmatpush1.msra.mxu0 0.0
        %1901 = vmatprep.subr.mxu0 0.0
        %1902 = vmatpush1.msra.mxu0 0.0
        %1903 = vmatprep.subr.mxu0 0.0
        %1904 = vmatpush1.msra.mxu0 0.0
        %1905 = vmatprep.subr.mxu0 0.0
        %1906 = vmatpush1.msra.mxu0 0.0
        %1907 = vmatprep.subr.mxu0 0.0
        %1908 = vmatpush1.msra.mxu0 0.0
        %1909 = vmatprep.subr.mxu0 0.0
        %1910 = vmatpush1.msra.mxu0 0.0
        %1911 = vmatprep.subr.mxu0 0.0
        %1912 = vmatpush1.msra.mxu0 0.0
        %1913 = vmatprep.subr.mxu0 0.0
        %1914 = vmatpush1.msra.mxu0 0.0
        %1915 = vmatprep.subr.mxu0 0.0
        %1916 = vmatpush1.msra.mxu0 0.0
        %1917 = vmatprep.subr.mxu0 0.0
        %1918 = vmatpush1.msra.mxu0 0.0
        %1919 = vmatprep.subr.mxu0 0.0
        %1920 = vmatpush1.msra.mxu0 0.0
        %1921 = vmatprep.subr.mxu0 0.0
        %1922 = vmatpush1.msra.mxu0 0.0
        %1923 = vmatprep.subr.mxu0 0.0
        %1924 = vmatpush1.msra.mxu0 0.0
        %1925 = vmatprep.subr.mxu0 0.0
        %1926 = vmatpush1.msra.mxu0 0.0
        %1927 = vmatprep.subr.mxu0 0.0
        %1928 = vmatpush1.msra.mxu0 0.0
        %1929 = vmatprep.subr.mxu0 0.0
        %1930 = vmatpush1.msra.mxu0 %v1818
        %1931 = vmatprep.subr.mxu0 0.0
        %1932 = vmatpush2.msra.mxu0 0.0
        %1933 = vmatprep.subr.mxu0 0.0
        %1934 = vmatpush2.msra.mxu0 0.0
        %1935 = vmatprep.subr.mxu0 0.0
        %1936 = vmatpush2.msra.mxu0 0.0
        %1937 = vmatprep.subr.mxu0 0.0
        %1938 = vmatpush2.msra.mxu0 0.0
        %1939 = vmatprep.subr.mxu0 0.0
        %1940 = vmatpush2.msra.mxu0 0.0
        %1941 = vmatprep.subr.mxu0 0.0
        %1942 = vmatpush2.msra.mxu0 0.0
        %1943 = vmatprep.subr.mxu0 0.0
        %1944 = vmatpush2.msra.mxu0 0.0
        %1945 = vmatprep.subr.mxu0 0.0
        %1946 = vmatpush2.msra.mxu0 0.0
        %1947 = vmatprep.subr.mxu0 0.0
        %1948 = vmatpush2.msra.mxu0 0.0
        %1949 = vmatprep.subr.mxu0 0.0
        %1950 = vmatpush2.msra.mxu0 0.0
        %1951 = vmatprep.subr.mxu0 0.0
        %1952 = vmatpush2.msra.mxu0 0.0
        %1953 = vmatprep.subr.mxu0 0.0
        %1954 = vmatpush2.msra.mxu0 0.0
        %1955 = vmatprep.subr.mxu0 0.0
        %1956 = vmatpush2.msra.mxu0 0.0
        %1957 = vmatprep.subr.mxu0 0.0
        %1958 = vmatpush2.msra.mxu0 0.0
        %1959 = vmatprep.subr.mxu0 0.0
        %1960 = vmatpush2.msra.mxu0 0.0
        %1961 = vmatprep.subr.mxu0 0.0
        %1962 = vmatpush2.msra.mxu0 0.0
        %1963 = vmatprep.mubr.f32.mxu0 0.0
        %1964 = vmatmul.mubr.f32.gmra.mxu0 %v1897
        %v1965 = vpop.f32.mrf.mxu0
        %v1966 = vadd.f32 0.0, %v1965
        %v1967 = vpop.f32.mrf.mxu0
        %1968 = vdwg.mxu0
        %v1969 = vmax.f32 %v1891, %v1966
        %v1970 = vld [vmem:[%s8] sm:$0xff]
        %v1971 = vld [vmem:[%s8 + $0x8] sm:$0xff]
        %v1972 = vld [vmem:[%s8 + $0x10] sm:$0xff]
        %v1973 = vld [vmem:[%s8 + $0x18] sm:$0xff]
        %v1974 = vld [vmem:[%s8 + $0x20] sm:$0xff]
        %v1975 = vld [vmem:[%s8 + $0x28] sm:$0xff]
        %v1976 = vld [vmem:[%s8 + $0x30] sm:$0xff]
        %v1977 = vld [vmem:[%s8 + $0x38] sm:$0xff]
        %v1979 = vsel %vm1150, %v1969, 0
        %1981 = vmatprep.subr.mxu0 0.0
        %1982 = vmatpush1.msra.mxu0 0.0
        %1983 = vmatprep.subr.mxu0 0.0
        %1984 = vmatpush1.msra.mxu0 0.0
        %1985 = vmatprep.subr.mxu0 0.0
        %1986 = vmatpush1.msra.mxu0 0.0
        %1987 = vmatprep.subr.mxu0 0.0
        %1988 = vmatpush1.msra.mxu0 0.0
        %1989 = vmatprep.subr.mxu0 0.0
        %1990 = vmatpush1.msra.mxu0 0.0
        %1991 = vmatprep.subr.mxu0 0.0
        %1992 = vmatpush1.msra.mxu0 0.0
        %1993 = vmatprep.subr.mxu0 0.0
        %1994 = vmatpush1.msra.mxu0 0.0
        %1995 = vmatprep.subr.mxu0 0.0
        %1996 = vmatpush1.msra.mxu0 0.0
        %1997 = vmatprep.subr.mxu0 0.0
        %1998 = vmatpush1.msra.mxu0 %v1977
        %1999 = vmatprep.subr.mxu0 0.0
        %2000 = vmatpush1.msra.mxu0 %v1976
        %2001 = vmatprep.subr.mxu0 0.0
        %2002 = vmatpush1.msra.mxu0 %v1975
        %2003 = vmatprep.subr.mxu0 0.0
        %2004 = vmatpush1.msra.mxu0 %v1974
        %2005 = vmatprep.subr.mxu0 0.0
        %2006 = vmatpush1.msra.mxu0 %v1973
        %2007 = vmatprep.subr.mxu0 0.0
        %2008 = vmatpush1.msra.mxu0 %v1972
        %2009 = vmatprep.subr.mxu0 0.0
        %2010 = vmatpush1.msra.mxu0 %v1971
        %2011 = vmatprep.subr.mxu0 0.0
        %2012 = vmatpush1.msra.mxu0 %v1970
        %2013 = vmatprep.subr.mxu0 0.0
        %2014 = vmatpush2.msra.mxu0 0.0
        %2015 = vmatprep.subr.mxu0 0.0
        %2016 = vmatpush2.msra.mxu0 0.0
        %2017 = vmatprep.subr.mxu0 0.0
        %2018 = vmatpush2.msra.mxu0 0.0
        %2019 = vmatprep.subr.mxu0 0.0
        %2020 = vmatpush2.msra.mxu0 0.0
        %2021 = vmatprep.subr.mxu0 0.0
        %2022 = vmatpush2.msra.mxu0 0.0
        %2023 = vmatprep.subr.mxu0 0.0
        %2024 = vmatpush2.msra.mxu0 0.0
        %2025 = vmatprep.subr.mxu0 0.0
        %2026 = vmatpush2.msra.mxu0 0.0
        %2027 = vmatprep.subr.mxu0 0.0
        %2028 = vmatpush2.msra.mxu0 0.0
        %2029 = vmatprep.subr.mxu0 0.0
        %2030 = vmatpush2.msra.mxu0 0.0
        %2031 = vmatprep.subr.mxu0 0.0
        %2032 = vmatpush2.msra.mxu0 0.0
        %2033 = vmatprep.subr.mxu0 0.0
        %2034 = vmatpush2.msra.mxu0 0.0
        %2035 = vmatprep.subr.mxu0 0.0
        %2036 = vmatpush2.msra.mxu0 0.0
        %2037 = vmatprep.subr.mxu0 0.0
        %2038 = vmatpush2.msra.mxu0 0.0
        %2039 = vmatprep.subr.mxu0 0.0
        %2040 = vmatpush2.msra.mxu0 0.0
        %2041 = vmatprep.subr.mxu0 0.0
        %2042 = vmatpush2.msra.mxu0 0.0
        %2043 = vmatprep.subr.mxu0 0.0
        %2044 = vmatpush2.msra.mxu0 0.0
        %2045 = vmatprep.mubr.f32.mxu0 0.0
        %2046 = vmatmul.mubr.f32.gmra.mxu0 %v1979
        %v2047 = vpop.f32.mrf.mxu0
        %v2048 = vadd.f32 0.0, %v2047
        %v2049 = vpop.f32.mrf.mxu0
        %2050 = vdwg.mxu0
        %s2051 = scalar_lea.vmem %s8, 64
        %v2052 = vld [vmem:[%s2051] sm:$0xff]
        %v2053 = vld [vmem:[%s2051 + $0x8] sm:$0xff]
        %v2054 = vld [vmem:[%s2051 + $0x10] sm:$0xff]
        %v2055 = vld [vmem:[%s2051 + $0x18] sm:$0xff]
        %v2056 = vld [vmem:[%s2051 + $0x20] sm:$0xff]
        %v2057 = vld [vmem:[%s2051 + $0x28] sm:$0xff]
        %v2058 = vld [vmem:[%s2051 + $0x30] sm:$0xff]
        %v2059 = vld [vmem:[%s2051 + $0x38] sm:$0xff]
        %2060 = vmatprep.subr.mxu0 0.0
        %2061 = vmatpush1.msra.mxu0 0.0
        %2062 = vmatprep.subr.mxu0 0.0
        %2063 = vmatpush1.msra.mxu0 0.0
        %2064 = vmatprep.subr.mxu0 0.0
        %2065 = vmatpush1.msra.mxu0 0.0
        %2066 = vmatprep.subr.mxu0 0.0
        %2067 = vmatpush1.msra.mxu0 0.0
        %2068 = vmatprep.subr.mxu0 0.0
        %2069 = vmatpush1.msra.mxu0 0.0
        %2070 = vmatprep.subr.mxu0 0.0
        %2071 = vmatpush1.msra.mxu0 0.0
        %2072 = vmatprep.subr.mxu0 0.0
        %2073 = vmatpush1.msra.mxu0 0.0
        %2074 = vmatprep.subr.mxu0 0.0
        %2075 = vmatpush1.msra.mxu0 0.0
        %2076 = vmatprep.subr.mxu0 0.0
        %2077 = vmatpush1.msra.mxu0 %v2059
        %2078 = vmatprep.subr.mxu0 0.0
        %2079 = vmatpush1.msra.mxu0 %v2058
        %2080 = vmatprep.subr.mxu0 0.0
        %2081 = vmatpush1.msra.mxu0 %v2057
        %2082 = vmatprep.subr.mxu0 0.0
        %2083 = vmatpush1.msra.mxu0 %v2056
        %2084 = vmatprep.subr.mxu0 0.0
        %2085 = vmatpush1.msra.mxu0 %v2055
        %2086 = vmatprep.subr.mxu0 0.0
        %2087 = vmatpush1.msra.mxu0 %v2054
        %2088 = vmatprep.subr.mxu0 0.0
        %2089 = vmatpush1.msra.mxu0 %v2053
        %2090 = vmatprep.subr.mxu0 0.0
        %2091 = vmatpush1.msra.mxu0 %v2052
        %2092 = vmatprep.subr.mxu0 0.0
        %2093 = vmatpush2.msra.mxu0 0.0
        %2094 = vmatprep.subr.mxu0 0.0
        %2095 = vmatpush2.msra.mxu0 0.0
        %2096 = vmatprep.subr.mxu0 0.0
        %2097 = vmatpush2.msra.mxu0 0.0
        %2098 = vmatprep.subr.mxu0 0.0
        %2099 = vmatpush2.msra.mxu0 0.0
        %2100 = vmatprep.subr.mxu0 0.0
        %2101 = vmatpush2.msra.mxu0 0.0
        %2102 = vmatprep.subr.mxu0 0.0
        %2103 = vmatpush2.msra.mxu0 0.0
        %2104 = vmatprep.subr.mxu0 0.0
        %2105 = vmatpush2.msra.mxu0 0.0
        %2106 = vmatprep.subr.mxu0 0.0
        %2107 = vmatpush2.msra.mxu0 0.0
        %2108 = vmatprep.subr.mxu0 0.0
        %2109 = vmatpush2.msra.mxu0 0.0
        %2110 = vmatprep.subr.mxu0 0.0
        %2111 = vmatpush2.msra.mxu0 0.0
        %2112 = vmatprep.subr.mxu0 0.0
        %2113 = vmatpush2.msra.mxu0 0.0
        %2114 = vmatprep.subr.mxu0 0.0
        %2115 = vmatpush2.msra.mxu0 0.0
        %2116 = vmatprep.subr.mxu0 0.0
        %2117 = vmatpush2.msra.mxu0 0.0
        %2118 = vmatprep.subr.mxu0 0.0
        %2119 = vmatpush2.msra.mxu0 0.0
        %2120 = vmatprep.subr.mxu0 0.0
        %2121 = vmatpush2.msra.mxu0 0.0
        %2122 = vmatprep.subr.mxu0 0.0
        %2123 = vmatpush2.msra.mxu0 0.0
        %2124 = vmatprep.mubr.f32.mxu0 0.0
        %2125 = vmatmul.mubr.f32.gmra.mxu0 %v1979
        %v2126 = vpop.f32.mrf.mxu0
        %v2127 = vadd.f32 0.0, %v2126
        %v2128 = vpop.f32.mrf.mxu0
        %2129 = vdwg.mxu0
        %v2130 = vmax.f32 %v2048, %v2127
        %v2131 = vpack.c.bf16 %v2130, %v2130
        %v2132 = vld [vmem:[%s9] sm:$0xf]
        %v2133 = vld [vmem:[%s9 + $0x4] sm:$0xf]
        %v2134 = vld [vmem:[%s9 + $0x8] sm:$0xf]
        %v2135 = vld [vmem:[%s9 + $0xc] sm:$0xf]
        %s2136 = scalar_lea.vmem %s9, 16
        %v2137 = vld [vmem:[%s2136] sm:$0xf]
        %v2138 = vld [vmem:[%s2136 + $0x4] sm:$0xf]
        %v2139 = vld [vmem:[%s2136 + $0x8] sm:$0xf]
        %v2140 = vld [vmem:[%s2136 + $0xc] sm:$0xf]
        %v2142 = vshrl.u32 %v2131, 16
        %v2148 = vunpack.c.l.b16 %v2137
        %v2149 = vunpack.c.l.b16 %v2138
        %v2150 = vunpack.c.l.b16 %v2139
        %v2151 = vunpack.c.l.b16 %v2140
        %v2152 = vpack.c.b16 %v2149, %v2148
        %v2153 = vpack.c.b16 %v2151, %v2150
        %vm2156 = vcmask 261120
        %v2158 = vsel %vm2156, %v2142, 0
        %2160 = vmatprep.subr.bf16.mxu0 0
        %2161 = vmatpush1.bf16.msra.mxu0 0
        %2162 = vmatprep.subr.bf16.mxu0 0
        %2163 = vmatpush1.bf16.msra.mxu0 0
        %2164 = vmatprep.subr.bf16.mxu0 0
        %2165 = vmatpush1.bf16.msra.mxu0 0
        %2166 = vmatprep.subr.bf16.mxu0 0
        %2167 = vmatpush1.bf16.msra.mxu0 0
        %2168 = vmatprep.subr.bf16.mxu0 0
        %2169 = vmatpush1.bf16.msra.mxu0 0
        %2170 = vmatprep.subr.bf16.mxu0 0
        %2171 = vmatpush1.bf16.msra.mxu0 0
        %2172 = vmatprep.subr.bf16.mxu0 0
        %2173 = vmatpush1.bf16.msra.mxu0 %v2153
        %2174 = vmatprep.subr.bf16.mxu0 0
        %2175 = vmatpush1.bf16.msra.mxu0 %v2152
        %2176 = vmatprep.subr.bf16.mxu0 0
        %2177 = vmatpush2.bf16.msra.mxu0 0
        %2178 = vmatprep.subr.bf16.mxu0 0
        %2179 = vmatpush2.bf16.msra.mxu0 0
        %2180 = vmatprep.subr.bf16.mxu0 0
        %2181 = vmatpush2.bf16.msra.mxu0 0
        %2182 = vmatprep.subr.bf16.mxu0 0
        %2183 = vmatpush2.bf16.msra.mxu0 0
        %2184 = vmatprep.subr.bf16.mxu0 0
        %2185 = vmatpush2.bf16.msra.mxu0 0
        %2186 = vmatprep.subr.bf16.mxu0 0
        %2187 = vmatpush2.bf16.msra.mxu0 0
        %2188 = vmatprep.subr.bf16.mxu0 0
        %2189 = vmatpush2.bf16.msra.mxu0 0
        %2190 = vmatprep.subr.bf16.mxu0 0
        %2191 = vmatpush2.bf16.msra.mxu0 0
        %2192 = vmatprep.mubr.bf16.mxu0 0
        %2193 = vmatmul.mubr.bf16.gmra.mxu0 %v2158
        %v2194 = vpop.f32.mrf.mxu0
        %v2195 = vadd.f32 0.0, %v2194
        %v2196 = vpop.f32.mrf.mxu0
        %v2197 = vpop.f32.mrf.mxu0
        %v2198 = vpop.f32.mrf.mxu0
        %2199 = vdwg.mxu0
        %v2204 = vunpack.c.l.b16 %v2132
        %v2205 = vunpack.c.l.b16 %v2133
        %v2206 = vunpack.c.l.b16 %v2134
        %v2207 = vunpack.c.l.b16 %v2135
        %v2208 = vpack.c.b16 %v2205, %v2204
        %v2209 = vpack.c.b16 %v2207, %v2206
        %v2212 = vsel %vm2156, %v2131, 0
        %2214 = vmatprep.subr.bf16.mxu0 0
        %2215 = vmatpush1.bf16.msra.mxu0 0
        %2216 = vmatprep.subr.bf16.mxu0 0
        %2217 = vmatpush1.bf16.msra.mxu0 0
        %2218 = vmatprep.subr.bf16.mxu0 0
        %2219 = vmatpush1.bf16.msra.mxu0 0
        %2220 = vmatprep.subr.bf16.mxu0 0
        %2221 = vmatpush1.bf16.msra.mxu0 0
        %2222 = vmatprep.subr.bf16.mxu0 0
        %2223 = vmatpush1.bf16.msra.mxu0 0
        %2224 = vmatprep.subr.bf16.mxu0 0
        %2225 = vmatpush1.bf16.msra.mxu0 0
        %2226 = vmatprep.subr.bf16.mxu0 0
        %2227 = vmatpush1.bf16.msra.mxu0 %v2209
        %2228 = vmatprep.subr.bf16.mxu0 0
        %2229 = vmatpush1.bf16.msra.mxu0 %v2208
        %2230 = vmatprep.subr.bf16.mxu0 0
        %2231 = vmatpush2.bf16.msra.mxu0 0
        %2232 = vmatprep.subr.bf16.mxu0 0
        %2233 = vmatpush2.bf16.msra.mxu0 0
        %2234 = vmatprep.subr.bf16.mxu0 0
        %2235 = vmatpush2.bf16.msra.mxu0 0
        %2236 = vmatprep.subr.bf16.mxu0 0
        %2237 = vmatpush2.bf16.msra.mxu0 0
        %2238 = vmatprep.subr.bf16.mxu0 0
        %2239 = vmatpush2.bf16.msra.mxu0 0
        %2240 = vmatprep.subr.bf16.mxu0 0
        %2241 = vmatpush2.bf16.msra.mxu0 0
        %2242 = vmatprep.subr.bf16.mxu0 0
        %2243 = vmatpush2.bf16.msra.mxu0 0
        %2244 = vmatprep.subr.bf16.mxu0 0
        %2245 = vmatpush2.bf16.msra.mxu0 0
        %2246 = vmatprep.mubr.bf16.mxu0 0
        %2247 = vmatmul.mubr.bf16.gmra.mxu0 %v2212
        %v2248 = vpop.f32.mrf.mxu0
        %v2249 = vadd.f32 %v2195, %v2248
        %v2250 = vpop.f32.mrf.mxu0
        %v2251 = vpop.f32.mrf.mxu0
        %v2252 = vpop.f32.mrf.mxu0
        %2253 = vdwg.mxu0
        %s2254 = scalar_lea.vmem %s9, 32
        %v2255 = vld [vmem:[%s2254] sm:$0xf]
        %v2256 = vld [vmem:[%s2254 + $0x4] sm:$0xf]
        %v2257 = vld [vmem:[%s2254 + $0x8] sm:$0xf]
        %v2258 = vld [vmem:[%s2254 + $0xc] sm:$0xf]
        %v2260 = vrot.slane %v2131, 1
        %v2265 = vunpack.c.l.b16 %v2255
        %v2266 = vunpack.c.l.b16 %v2256
        %v2267 = vunpack.c.l.b16 %v2257
        %v2268 = vunpack.c.l.b16 %v2258
        %v2269 = vpack.c.b16 %v2266, %v2265
        %v2270 = vpack.c.b16 %v2268, %v2267
        %v2274 = vsel %vm2156, %v2260, 0
        %2276 = vmatprep.subr.bf16.mxu0 0
        %2277 = vmatpush1.bf16.msra.mxu0 0
        %2278 = vmatprep.subr.bf16.mxu0 0
        %2279 = vmatpush1.bf16.msra.mxu0 0
        %2280 = vmatprep.subr.bf16.mxu0 0
        %2281 = vmatpush1.bf16.msra.mxu0 0
        %2282 = vmatprep.subr.bf16.mxu0 0
        %2283 = vmatpush1.bf16.msra.mxu0 0
        %2284 = vmatprep.subr.bf16.mxu0 0
        %2285 = vmatpush1.bf16.msra.mxu0 0
        %2286 = vmatprep.subr.bf16.mxu0 0
        %2287 = vmatpush1.bf16.msra.mxu0 0
        %2288 = vmatprep.subr.bf16.mxu0 0
        %2289 = vmatpush1.bf16.msra.mxu0 %v2270
        %2290 = vmatprep.subr.bf16.mxu0 0
        %2291 = vmatpush1.bf16.msra.mxu0 %v2269
        %2292 = vmatprep.subr.bf16.mxu0 0
        %2293 = vmatpush2.bf16.msra.mxu0 0
        %2294 = vmatprep.subr.bf16.mxu0 0
        %2295 = vmatpush2.bf16.msra.mxu0 0
        %2296 = vmatprep.subr.bf16.mxu0 0
        %2297 = vmatpush2.bf16.msra.mxu0 0
        %2298 = vmatprep.subr.bf16.mxu0 0
        %2299 = vmatpush2.bf16.msra.mxu0 0
        %2300 = vmatprep.subr.bf16.mxu0 0
        %2301 = vmatpush2.bf16.msra.mxu0 0
        %2302 = vmatprep.subr.bf16.mxu0 0
        %2303 = vmatpush2.bf16.msra.mxu0 0
        %2304 = vmatprep.subr.bf16.mxu0 0
        %2305 = vmatpush2.bf16.msra.mxu0 0
        %2306 = vmatprep.subr.bf16.mxu0 0
        %2307 = vmatpush2.bf16.msra.mxu0 0
        %2308 = vmatprep.mubr.bf16.mxu0 0
        %2309 = vmatmul.mubr.bf16.gmra.mxu0 %v2274
        %v2310 = vpop.f32.mrf.mxu0
        %v2311 = vadd.f32 0.0, %v2310
        %v2312 = vpop.f32.mrf.mxu0
        %v2313 = vpop.f32.mrf.mxu0
        %v2314 = vpop.f32.mrf.mxu0
        %2315 = vdwg.mxu0
        %v2316 = vadd.f32 %v2249, %v2311
        %s2317 = scalar_lea.vmem %s9, 48
        %v2318 = vld [vmem:[%s2317] sm:$0xf]
        %v2319 = vld [vmem:[%s2317 + $0x4] sm:$0xf]
        %v2320 = vld [vmem:[%s2317 + $0x8] sm:$0xf]
        %v2321 = vld [vmem:[%s2317 + $0xc] sm:$0xf]
        %v2322 = vrot.slane %v2142, 1
        %v2327 = vunpack.c.l.b16 %v2318
        %v2328 = vunpack.c.l.b16 %v2319
        %v2329 = vunpack.c.l.b16 %v2320
        %v2330 = vunpack.c.l.b16 %v2321
        %v2331 = vpack.c.b16 %v2328, %v2327
        %v2332 = vpack.c.b16 %v2330, %v2329
        %v2336 = vsel %vm2156, %v2322, 0
        %2338 = vmatprep.subr.bf16.mxu0 0
        %2339 = vmatpush1.bf16.msra.mxu0 0
        %2340 = vmatprep.subr.bf16.mxu0 0
        %2341 = vmatpush1.bf16.msra.mxu0 0
        %2342 = vmatprep.subr.bf16.mxu0 0
        %2343 = vmatpush1.bf16.msra.mxu0 0
        %2344 = vmatprep.subr.bf16.mxu0 0
        %2345 = vmatpush1.bf16.msra.mxu0 0
        %2346 = vmatprep.subr.bf16.mxu0 0
        %2347 = vmatpush1.bf16.msra.mxu0 0
        %2348 = vmatprep.subr.bf16.mxu0 0
        %2349 = vmatpush1.bf16.msra.mxu0 0
        %2350 = vmatprep.subr.bf16.mxu0 0
        %2351 = vmatpush1.bf16.msra.mxu0 %v2332
        %2352 = vmatprep.subr.bf16.mxu0 0
        %2353 = vmatpush1.bf16.msra.mxu0 %v2331
        %2354 = vmatprep.subr.bf16.mxu0 0
        %2355 = vmatpush2.bf16.msra.mxu0 0
        %2356 = vmatprep.subr.bf16.mxu0 0
        %2357 = vmatpush2.bf16.msra.mxu0 0
        %2358 = vmatprep.subr.bf16.mxu0 0
        %2359 = vmatpush2.bf16.msra.mxu0 0
        %2360 = vmatprep.subr.bf16.mxu0 0
        %2361 = vmatpush2.bf16.msra.mxu0 0
        %2362 = vmatprep.subr.bf16.mxu0 0
        %2363 = vmatpush2.bf16.msra.mxu0 0
        %2364 = vmatprep.subr.bf16.mxu0 0
        %2365 = vmatpush2.bf16.msra.mxu0 0
        %2366 = vmatprep.subr.bf16.mxu0 0
        %2367 = vmatpush2.bf16.msra.mxu0 0
        %2368 = vmatprep.subr.bf16.mxu0 0
        %2369 = vmatpush2.bf16.msra.mxu0 0
        %2370 = vmatprep.mubr.bf16.mxu0 0
        %2371 = vmatmul.mubr.bf16.gmra.mxu0 %v2336
        %v2372 = vpop.f32.mrf.mxu0
        %v2373 = vadd.f32 0.0, %v2372
        %v2374 = vpop.f32.mrf.mxu0
        %v2375 = vpop.f32.mrf.mxu0
        %v2376 = vpop.f32.mrf.mxu0
        %2377 = vdwg.mxu0
        %v2378 = vadd.f32 %v2316, %v2373
        %v2379 = vld [vmem:[%s10] sm:$0x1]
        %v2380 = vadd.f32 %v2378, %v2379
        %v2381 = vmax.f32 %v2380, 0.0
        %v2382 = vpack.c.bf16 %v2381, %v2381
        %v2383 = vld [vmem:[%s11] sm:$0xf]
        %v2384 = vld [vmem:[%s11 + $0x4] sm:$0xf]
        %v2385 = vld [vmem:[%s11 + $0x8] sm:$0xf]
        %v2386 = vld [vmem:[%s11 + $0xc] sm:$0xf]
        %v2387 = vld [vmem:[%s11 + $0x10] sm:$0xf]
        %v2388 = vld [vmem:[%s11 + $0x14] sm:$0xf]
        %v2389 = vld [vmem:[%s11 + $0x18] sm:$0xf]
        %v2390 = vld [vmem:[%s11 + $0x1c] sm:$0xf]
        %v2391 = vld [vmem:[%s12] sm:$0x1]
        %v2400 = vunpack.c.l.b16 %v2383
        %v2401 = vunpack.c.l.b16 %v2384
        %v2402 = vunpack.c.l.b16 %v2385
        %v2403 = vunpack.c.l.b16 %v2386
        %v2404 = vunpack.c.l.b16 %v2387
        %v2405 = vunpack.c.l.b16 %v2388
        %v2406 = vunpack.c.l.b16 %v2389
        %v2407 = vunpack.c.l.b16 %v2390
        %v2408 = vpack.c.b16 %v2401, %v2400
        %v2409 = vpack.c.b16 %v2403, %v2402
        %v2410 = vpack.c.b16 %v2405, %v2404
        %v2411 = vpack.c.b16 %v2407, %v2406
        %v2417 = vsel %vm1150, %v2382, 0
        %2419 = vmatprep.subr.bf16.mxu0 0
        %2420 = vmatpush1.bf16.msra.mxu0 0
        %2421 = vmatprep.subr.bf16.mxu0 0
        %2422 = vmatpush1.bf16.msra.mxu0 0
        %2423 = vmatprep.subr.bf16.mxu0 0
        %2424 = vmatpush1.bf16.msra.mxu0 0
        %2425 = vmatprep.subr.bf16.mxu0 0
        %2426 = vmatpush1.bf16.msra.mxu0 0
        %2427 = vmatprep.subr.bf16.mxu0 0
        %2428 = vmatpush1.bf16.msra.mxu0 %v2411
        %2429 = vmatprep.subr.bf16.mxu0 0
        %2430 = vmatpush1.bf16.msra.mxu0 %v2410
        %2431 = vmatprep.subr.bf16.mxu0 0
        %2432 = vmatpush1.bf16.msra.mxu0 %v2409
        %2433 = vmatprep.subr.bf16.mxu0 0
        %2434 = vmatpush1.bf16.msra.mxu0 %v2408
        %2435 = vmatprep.subr.bf16.mxu0 0
        %2436 = vmatpush2.bf16.msra.mxu0 0
        %2437 = vmatprep.subr.bf16.mxu0 0
        %2438 = vmatpush2.bf16.msra.mxu0 0
        %2439 = vmatprep.subr.bf16.mxu0 0
        %2440 = vmatpush2.bf16.msra.mxu0 0
        %2441 = vmatprep.subr.bf16.mxu0 0
        %2442 = vmatpush2.bf16.msra.mxu0 0
        %2443 = vmatprep.subr.bf16.mxu0 0
        %2444 = vmatpush2.bf16.msra.mxu0 0
        %2445 = vmatprep.subr.bf16.mxu0 0
        %2446 = vmatpush2.bf16.msra.mxu0 0
        %2447 = vmatprep.subr.bf16.mxu0 0
        %2448 = vmatpush2.bf16.msra.mxu0 0
        %2449 = vmatprep.subr.bf16.mxu0 0
        %2450 = vmatpush2.bf16.msra.mxu0 0
        %2451 = vmatprep.mubr.bf16.mxu0 0
        %2452 = vmatmul.mubr.bf16.gmra.mxu0 %v2417
        %v2453 = vpop.f32.mrf.mxu0
        %v2454 = vadd.f32 %v2391, %v2453
        %v2455 = vpop.f32.mrf.mxu0
        %v2456 = vpop.f32.mrf.mxu0
        %v2457 = vpop.f32.mrf.mxu0
        %2458 = vdwg.mxu0
        %vm2459 = vcmask 204800
        %v2460 = vsel %vm2459, %v2454, -inf
        %2461 = vmax.xlane.f32.xlu0 %v2460
        %v2462 = vpop.xlane.xlu0 %2461
        %v2463 = vsub.f32 %v2454, %v2462
        %v2464 = vmul.f32 %v2463, 1.442695
        %v2465 = vpow.pop %v2464
        %v2466 = vsel %vm2459, %v2465, 0.0
        %2467 = vadd.xlane.f32.xlu0 %v2466
        %v2468 = vpop.xlane.xlu0 %2467
        %v2469 = vlog2.pop %v2468
        %v2470 = vmul.f32 %v2469, 0.6931472
        %v2471 = vsub.f32 %v2463, %v2470
        %2472 = vst.msk [vmem:[%s432] sm:$0x1] %vm2459, %v2471
        %s2473 = sand.u32 %s313, 1
        %s2474 = scalar_lea.sflag [#allocation3], %s2473
        %s2475 = sand.u32 %s313, 1
        %s2476 = scalar_lea.vmem [#allocation2], %s2475
        // Predicated region
        $region73: #{my_model_forward.1} parent=71 // pred_check
          %p2477 = pneg %p323
        $region74: #{my_model_forward.1} parent=71 // pred_check_branch
          %2479 = sbr.rel (%p2477) target = $region76
        $region75: #{my_model_forward.1} parent=71 // pred_region
          %s2481 = ssub.s32 16, 16
          %2482 = vsyncadd %s2474, %s2481
          %s2483 = smul.addr %s27, 16
          %s2484 = scalar_lea.hbm %s13, %s2483
          %s2486 = sshll.u32 %s2476, 4
          %s2487 = int_to_ptr.vmem [resolvable:$true] %s2486
          %2489 = dma.vmem_to_hbm [thread:$0]  %s2487, 16, %s2484, %s2474
        $region76: #{my_model_forward.1} parent=71 // pred_fallthru
          _
      $region72: #{my_model_forward.1} parent=5 // pred_fallthru
        _
      %p2490 = scmp.le.s32.totalorder 2, %s22
      // Predicated region
      $region77: #{my_model_forward.1} parent=5 // pred_check
        %p2491 = pneg %p2490
      $region78: #{my_model_forward.1} parent=5 // pred_check_branch
        %2493 = sbr.rel (%p2491) target = $region80
      $region79: #{my_model_forward.1} parent=5 // pred_region
        %s2494 = ssub.s32 %s22, 2
        // Predicated region
        $region81: #{my_model_forward.1} parent=79 // pred_check
          %p2495 = pneg %p329
        $region82: #{my_model_forward.1} parent=79 // pred_check_branch
          %2497 = sbr.rel (%p2495) target = $region84
        $region83: #{my_model_forward.1} parent=79 // pred_region
          %s2498 = sand.u32 %s314, 1
          %s2499 = scalar_lea.sflag [#allocation3], %s2498
          %s2500 = sand.u32 %s314, 1
          %s2501 = scalar_lea.vmem [#allocation2], %s2500
          %2502 = dma.done %s2499, 16
        $region84: #{my_model_forward.1} parent=79 // pred_fallthru
          _
      $region80: #{my_model_forward.1} parent=5 // pred_fallthru
        _
    $region6: #{my_model_forward.1} parent=1 // loop_footer
      %s26 = sadd.s32 1, %s22
    $region7: #{my_model_forward.1} parent=1 // loop_footer_branch
      %21 = sbr.rel target = $region3
    $region8: #{my_model_forward.1} parent=1 // loop_exit
      _
    %2503 = vsyncpa [#allocation3], 1
    %s2504 = scalar_lea.sflag [#allocation3], 1
    %2505 = vsyncpa %s2504, 1

</llo_original>
